<compile_context>
chip_gen: v7x
topology: tpu7x:2x2x1
jax: 0.10.0
libtpu: 0.0.40
codegen_flags: <defaults>
</compile_context>

<pallas_src>
import functools

import jax
import jax.numpy as jnp
from jax.experimental import pallas as pl
from jax.experimental.pallas import tpu as pltpu


# --------------------------------------------------------------------------- #
# Kernel
# --------------------------------------------------------------------------- #
def _gnn_rnn_kernel(x_ref, h_ref,
                    w_self_ref, b_self_ref, w_ent_ref,
                    wgx_ref, wgs_ref, wgh_ref, bg_ref,
                    w_oh_ref, b_oh_ref,
                    out_ref):
    f32 = jnp.float32
    x = x_ref[...]                      # [TB, IN]  raw observation rows
    h = h_ref[...]                      # [TB, H]   previous hidden state

    # --- self branch: relu(self_input @ W_self + b).  The [move | blood]
    # column gather is folded into zero rows of w_self_full, so LHS is x.
    self_h = jnp.maximum(
        jnp.dot(x, w_self_ref[...], preferred_element_type=f32)
        + b_self_ref[...], 0.0)                                    # [TB, H]

    # --- agents + enemies branch (merged).  One block-diagonal matmul puts
    # each entity's H-wide hidden in its own 2H-lane chunk (agents in the first
    # H lanes, enemies in the last H).  relu per entity, then sum the
    # vreg-aligned 128-lane columns.  The bias-free enemy fc(zeros) of the
    # reference is exactly zero, so its subtraction is a no-op.
    ent = jnp.maximum(
        jnp.dot(x, w_ent_ref[...], preferred_element_type=f32), 0.0)  # [TB, NEp*2H]
    ncol = ent.shape[-1] // 128
    s = ent[:, 0:128]
    for v in range(1, ncol):            # static unroll; slices are vreg-aligned
        s = s + ent[:, v * 128:(v + 1) * 128]                      # [TB, 128]

    # --- GRUCell (PyTorch gate order r, z, n), gate-split: each gate's
    # pre-activation is a direct MXU accumulation (no concat, no gate slices).
    def gate(g, with_h):
        acc = (jnp.dot(self_h, wgx_ref[g], preferred_element_type=f32)
               + jnp.dot(s, wgs_ref[g], preferred_element_type=f32))
        if with_h:
            acc = acc + jnp.dot(h, wgh_ref[g], preferred_element_type=f32)
        return acc

    pre_r = gate(0, True) + bg_ref[0]
    pre_z = gate(1, True) + bg_ref[1]
    i_n = gate(2, False) + bg_ref[2]
    h_n = jnp.dot(h, wgh_ref[2], preferred_element_type=f32) + bg_ref[3]

    r = jax.nn.sigmoid(pre_r)
    z = jax.nn.sigmoid(pre_z)
    n = jnp.tanh(i_n + r * h_n)
    h_new = (1.0 - z) * n + z * h                                  # [TB, H]

    # --- fused head: [h_new | q] = h_new @ [I | W_out] + [0 | b_out]
    # -> one lane-dense store instead of two narrow masked stores.
    out_ref[...] = (jnp.dot(h_new, w_oh_ref[...], preferred_element_type=f32)
                    + b_oh_ref[...])


# --------------------------------------------------------------------------- #
# Weight packing (done once, outside the per-step call)
# --------------------------------------------------------------------------- #
def pack_gnn_params(params, cfg, input_dim):
    H = cfg["arn_hidden_size"]
    mf, ef, af = cfg["move_feats_size"], cfg["enemy_feats_size"], cfg["agent_feats_size"]
    n_en, n_ag_others = cfg["enemies_num"], cfg["agents_num"] - 1

    enemies_feat_start = mf
    agents_feat_start = mf + ef * n_en + 1
    blood_feat_start = agents_feat_start + af * n_ag_others + 1

    f32 = jnp.float32

    # self branch: fold the [move | blood] gather into zero rows.
    w_self = params["w_self"].astype(f32)                      # [5, H]
    w_self_full = jnp.zeros((input_dim, H), f32)
    w_self_full = w_self_full.at[:mf].set(w_self[:mf])
    w_self_full = w_self_full.at[blood_feat_start].set(w_self[mf])

    # merged entity weight: block diagonal, one 2H-lane chunk per entity.
    chunk = 2 * H
    assert 128 % chunk == 0, "packing assumes 2*arn_hidden_size divides 128"
    cpv = 128 // chunk                                         # entity chunks per vreg
    ne = n_ag_others + n_en
    ne_pad = -(-ne // cpv) * cpv                               # pad to a whole vreg column
    w_ent = jnp.zeros((input_dim, ne_pad * chunk), f32)
    slot = 0
    for a in range(n_ag_others):                               # agents -> first H of chunk
        r0 = agents_feat_start + a * af
        w_ent = w_ent.at[r0:r0 + af, slot * chunk:slot * chunk + H].set(
            params["w_ag"].astype(f32))
        slot += 1
    for e in range(n_en):                                      # enemies -> last H of chunk
        r0 = enemies_feat_start + e * ef
        w_ent = w_ent.at[r0:r0 + ef, slot * chunk + H:(slot + 1) * chunk].set(
            params["w_en"].astype(f32))
        slot += 1

    # GRU: split weights per gate (columns of w_ih / w_hh are [r | z | n]).
    w_ih, w_hh = params["w_ih"].astype(f32), params["w_hh"].astype(f32)
    b_ih, b_hh = params["b_ih"].astype(f32), params["b_hh"].astype(f32)
    col = lambda w, g: w[:, g * H:(g + 1) * H]
    wgx = jnp.stack([col(w_ih[:H], g) for g in range(3)])      # [3, H, H]   (self_h)
    # the summed-entity activation is [sum_ag | sum_en] repeated cpv times over
    # 128 lanes, so its GRU input weight is w_ih[H:3H] tiled cpv times along K.
    wgs = jnp.stack([jnp.tile(col(w_ih[H:3 * H], g), (cpv, 1))
                     for g in range(3)])                       # [3, 128, H] (entity sum)
    wgh = jnp.stack([col(w_hh, g) for g in range(3)])          # [3, H, H]   (h)
    bg = jnp.stack([b_ih[:, :H] + b_hh[:, :H],                 # r
                    b_ih[:, H:2 * H] + b_hh[:, H:2 * H],       # z
                    b_ih[:, 2 * H:],                           # i_n
                    b_hh[:, 2 * H:]])                          # h_n  -> [4, 1, H]

    # fused output head: [h_new | q]
    w_oh = jnp.concatenate([jnp.eye(H, dtype=f32), params["w_out"].astype(f32)], axis=1)
    b_oh = jnp.concatenate([jnp.zeros((1, H), f32), params["b_out"].astype(f32)], axis=1)

    return dict(w_self=w_self_full, b_self=params["b_self"].astype(f32), w_ent=w_ent,
                wgx=wgx, wgs=wgs, wgh=wgh, bg=bg, w_oh=w_oh, b_oh=b_oh)


# --------------------------------------------------------------------------- #
# Forward wrapper
# --------------------------------------------------------------------------- #
def gnn_sum_rnn_agent_forward(inputs, hidden_state, packed, cfg, *, block_b=512):
    """Pallas-backed GNNSumRnnAgent.forward.  `packed` comes from pack_gnn_params."""
    B, input_dim = inputs.shape
    H = cfg["arn_hidden_size"]
    n_act = cfg["n_actions"]

    x = inputs.astype(jnp.float32)
    h_in = hidden_state.reshape(-1, H).astype(jnp.float32)

    # batch tiling: TB rows per grid step; pad B so every block is full
    # (padded rows are zeros -> finite values, dropped after the call).
    tb = min(block_b, B)
    b_pad = -(-B // tb) * tb
    if b_pad != B:
        x = jnp.pad(x, ((0, b_pad - B), (0, 0)))
        h_in = jnp.pad(h_in, ((0, b_pad - B), (0, 0)))
    grid = (b_pad // tb,)

    def batch_spec(width):
        return pl.BlockSpec((tb, width), lambda i: (i, 0))

    def resident(arr):                       # weights: full-extent, VMEM-resident
        return pl.BlockSpec(arr.shape, lambda i, nd=arr.ndim: (0,) * nd)

    w_names = ("w_self", "b_self", "w_ent", "wgx", "wgs", "wgh", "bg", "w_oh", "b_oh")
    weights = [packed[k] for k in w_names]

    out = pl.pallas_call(
        _gnn_rnn_kernel,
        out_shape=jax.ShapeDtypeStruct((b_pad, H + n_act), jnp.float32),
        grid=grid,
        in_specs=[batch_spec(input_dim), batch_spec(H)] + [resident(w) for w in weights],
        out_specs=batch_spec(H + n_act),
        compiler_params=pltpu.CompilerParams(dimension_semantics=("parallel",)),
    )(x, h_in, *weights)

    out = out[:B]
    h_out = out[:, :H]
    q = out[:, H:]
    return q, h_out


# --------------------------------------------------------------------------- #
# Pure-JAX reference (mirrors the PyTorch module) and parameter construction
# --------------------------------------------------------------------------- #
def _reference_forward(inputs, hidden_state, params, cfg):
    B = inputs.shape[0]
    H = cfg["arn_hidden_size"]
    mf, ef, af = cfg["move_feats_size"], cfg["enemy_feats_size"], cfg["agent_feats_size"]
    n_en, n_ag = cfg["enemies_num"], cfg["agents_num"]

    enemies_feat_start = mf
    agents_feat_start = mf + ef * n_en + 1
    blood_feat_start = agents_feat_start + af * (n_ag - 1) + 1

    self_input = jnp.concatenate(
        [inputs[:, :mf], inputs[:, blood_feat_start:blood_feat_start + 1]], axis=1)
    agents_feats = inputs[:, agents_feat_start:
                          agents_feat_start + af * (n_ag - 1)].reshape(B, n_ag - 1, af)
    enemies_feats = inputs[:, enemies_feat_start:
                           enemies_feat_start + ef * n_en].reshape(B, n_en, ef)

    self_h = jax.nn.relu(self_input @ params["w_self"] + params["b_self"])
    sum_ag = jnp.sum(jax.nn.relu(jnp.einsum("bnf,fh->bnh", agents_feats, params["w_ag"])), axis=1)
    sum_en = jnp.sum(jax.nn.relu(jnp.einsum("bnf,fh->bnh", enemies_feats, params["w_en"])), axis=1)

    all_feat = jnp.concatenate([self_h, sum_ag, sum_en], axis=-1)
    h = hidden_state.reshape(-1, H)
    gi = all_feat @ params["w_ih"] + params["b_ih"]
    gh = h @ params["w_hh"] + params["b_hh"]
    r = jax.nn.sigmoid(gi[:, :H] + gh[:, :H])
    z = jax.nn.sigmoid(gi[:, H:2 * H] + gh[:, H:2 * H])
    n = jnp.tanh(gi[:, 2 * H:] + r * gh[:, 2 * H:])
    h_new = (1.0 - z) * n + z * h
    q = h_new @ params["w_out"] + params["b_out"]
    return q, h_new


def _make_params(key, cfg):
    H = cfg["arn_hidden_size"]
    ef, af = cfg["enemy_feats_size"], cfg["agent_feats_size"]
    n_act = cfg["n_actions"]
    ks = jax.random.split(key, 10)
    s = 0.1
    return {
        # self_info_fc1: Linear(5, H) stored transposed [5, H]
        "w_self": s * jax.random.normal(ks[0], (5, H), jnp.float32),
        "b_self": s * jax.random.normal(ks[1], (1, H), jnp.float32),
        # agents_info_fc1 / enemies_info_fc1: bias-free, stored [in, H]
        "w_ag": s * jax.random.normal(ks[2], (af, H), jnp.float32),
        "w_en": s * jax.random.normal(ks[3], (ef, H), jnp.float32),
        # GRUCell(3H -> H): weights stored transposed [in, 3H(gates r|z|n)]
        "w_ih": s * jax.random.normal(ks[4], (3 * H, 3 * H), jnp.float32),
        "b_ih": s * jax.random.normal(ks[5], (1, 3 * H), jnp.float32),
        "w_hh": s * jax.random.normal(ks[6], (H, 3 * H), jnp.float32),
        "b_hh": s * jax.random.normal(ks[7], (1, 3 * H), jnp.float32),
        # action_ouput_fc: Linear(H, n_actions)
        "w_out": s * jax.random.normal(ks[8], (H, n_act), jnp.float32),
        "b_out": s * jax.random.normal(ks[9], (1, n_act), jnp.float32),
    }


if __name__ == "__main__":
    cfg = dict(
        move_feats_size=4,      # self_info_fc1 expects 5 = move(4) + blood(1)
        enemy_feats_size=5,
        agent_feats_size=5,
        enemies_num=3,
        agents_num=4,
        arn_hidden_size=32,
        n_actions=8,
    )
    # flat obs: move(4) + enemies(15) + enemy_cnt(1) + agents(15) + agent_cnt(1)
    #           + blood(1) + other(3) = 40
    input_dim = (cfg["move_feats_size"]
                 + cfg["enemy_feats_size"] * cfg["enemies_num"] + 1
                 + cfg["agent_feats_size"] * (cfg["agents_num"] - 1) + 1
                 + 1 + 3)

    key = jax.random.PRNGKey(0)
    k_p, k_small, k_big = jax.random.split(key, 3)
    params = _make_params(k_p, cfg)
    packed = pack_gnn_params(params, cfg, input_dim)

    fwd = jax.jit(functools.partial(gnn_sum_rnn_agent_forward, cfg=cfg))

    # small case (single full-extent block) + a larger case exercising the
    # batch grid, megacore-parallel semantics and the padding path.
    for name, b, kk in (("small", 2, k_small), ("gridded", 1000, k_big)):
        k_in, k_h = jax.random.split(kk)
        inputs = jax.random.normal(k_in, (b, input_dim), jnp.float32)
        hidden = jax.random.normal(k_h, (b, cfg["arn_hidden_size"]), jnp.float32)

        q, h_out = fwd(inputs, hidden, packed)
        jax.block_until_ready((q, h_out))

        q_ref, h_ref = _reference_forward(inputs, hidden, params, cfg)
        assert q.shape == (b, cfg["n_actions"]), name
        assert h_out.shape == (b, cfg["arn_hidden_size"]), name
        assert jnp.allclose(q, q_ref, atol=1e-4, rtol=1e-4), f"{name}: q mismatch"
        assert jnp.allclose(h_out, h_ref, atol=1e-4, rtol=1e-4), f"{name}: h mismatch"

    print("KERNEL_OK")
</pallas_src>

<mosaic_0001>
module attributes {stable_mosaic.version = 11 : i64} {
  func.func @_gnn_rnn_kernel(%arg0: i32, %arg1: memref<2x40xf32, #tpu.memory_space<vmem>>, %arg2: memref<2x32xf32, #tpu.memory_space<vmem>>, %arg3: memref<40x32xf32, #tpu.memory_space<vmem>>, %arg4: memref<1x32xf32, #tpu.memory_space<vmem>>, %arg5: memref<40x384xf32, #tpu.memory_space<vmem>>, %arg6: memref<3x32x32xf32, #tpu.memory_space<vmem>>, %arg7: memref<3x128x32xf32, #tpu.memory_space<vmem>>, %arg8: memref<3x32x32xf32, #tpu.memory_space<vmem>>, %arg9: memref<4x1x32xf32, #tpu.memory_space<vmem>>, %arg10: memref<32x40xf32, #tpu.memory_space<vmem>>, %arg11: memref<1x40xf32, #tpu.memory_space<vmem>>, %arg12: memref<2x40xf32, #tpu.memory_space<vmem>>) attributes {dimension_semantics = [#tpu.dimension_semantics<parallel>], iteration_bounds = array<i64: 1>, scalar_prefetch = 0 : i64, scratch_operands = 0 : i64, tpu.core_type = #tpu.core_type<tc>, window_params = [{transform_indices = @transform_0, window_bounds = array<i64: 2, 40>}, {transform_indices = @transform_1, window_bounds = array<i64: 2, 32>}, {pipeline_mode = #tpu.pipeline_mode<synchronous>, transform_indices = @transform_2, window_bounds = array<i64: 40, 32>}, {pipeline_mode = #tpu.pipeline_mode<synchronous>, transform_indices = @transform_3, window_bounds = array<i64: 1, 32>}, {pipeline_mode = #tpu.pipeline_mode<synchronous>, transform_indices = @transform_4, window_bounds = array<i64: 40, 384>}, {pipeline_mode = #tpu.pipeline_mode<synchronous>, transform_indices = @transform_5, window_bounds = array<i64: 3, 32, 32>}, {pipeline_mode = #tpu.pipeline_mode<synchronous>, transform_indices = @transform_6, window_bounds = array<i64: 3, 128, 32>}, {pipeline_mode = #tpu.pipeline_mode<synchronous>, transform_indices = @transform_7, window_bounds = array<i64: 3, 32, 32>}, {pipeline_mode = #tpu.pipeline_mode<synchronous>, transform_indices = @transform_8, window_bounds = array<i64: 4, 1, 32>}, {pipeline_mode = #tpu.pipeline_mode<synchronous>, transform_indices = @transform_9, window_bounds = array<i64: 32, 40>}, {pipeline_mode = #tpu.pipeline_mode<synchronous>, transform_indices = @transform_10, window_bounds = array<i64: 1, 40>}, {transform_indices = @transform_11, window_bounds = array<i64: 2, 40>}]} {
    %c0 = arith.constant 0 : index
    %c0_0 = arith.constant 0 : index
    %0 = vector.load %arg1[%c0, %c0_0] : memref<2x40xf32, #tpu.memory_space<vmem>>, vector<2x40xf32>
    %c0_1 = arith.constant 0 : index
    %c0_2 = arith.constant 0 : index
    %1 = vector.load %arg2[%c0_1, %c0_2] : memref<2x32xf32, #tpu.memory_space<vmem>>, vector<2x32xf32>
    %c0_3 = arith.constant 0 : index
    %c0_4 = arith.constant 0 : index
    %2 = vector.load %arg3[%c0_3, %c0_4] : memref<40x32xf32, #tpu.memory_space<vmem>>, vector<40x32xf32>
    %cst = arith.constant dense<0.000000e+00> : vector<2x32xf32>
    %3 = tpu.matmul %0, %2, %cst {dimension_numbers = #tpu.dot_dimension_numbers<[1], [0], [0], [1], [0, 0, 1, 1], [], []>} : vector<2x40xf32>, vector<40x32xf32>, vector<2x32xf32> -> vector<2x32xf32>
    %c0_5 = arith.constant 0 : index
    %c0_6 = arith.constant 0 : index
    %4 = vector.load %arg4[%c0_5, %c0_6] : memref<1x32xf32, #tpu.memory_space<vmem>>, vector<1x32xf32>
    %5 = vector.broadcast %4 : vector<1x32xf32> to vector<2x32xf32>
    %6 = arith.addf %3, %5 : vector<2x32xf32>
    %cst_7 = arith.constant 0.000000e+00 : f32
    %7 = vector.broadcast %cst_7 : f32 to vector<2x32xf32>
    %8 = arith.maximumf %6, %7 : vector<2x32xf32>
    %c0_8 = arith.constant 0 : index
    %c0_9 = arith.constant 0 : index
    %9 = vector.load %arg5[%c0_8, %c0_9] : memref<40x384xf32, #tpu.memory_space<vmem>>, vector<40x384xf32>
    %cst_10 = arith.constant dense<0.000000e+00> : vector<2x384xf32>
    %10 = tpu.matmul %0, %9, %cst_10 {dimension_numbers = #tpu.dot_dimension_numbers<[1], [0], [0], [1], [0, 0, 1, 1], [], []>} : vector<2x40xf32>, vector<40x384xf32>, vector<2x384xf32> -> vector<2x384xf32>
    %cst_11 = arith.constant 0.000000e+00 : f32
    %11 = vector.broadcast %cst_11 : f32 to vector<2x384xf32>
    %12 = arith.maximumf %10, %11 : vector<2x384xf32>
    %13 = vector.extract_strided_slice %12 {offsets = [0, 0], sizes = [2, 128], strides = [1, 1]} : vector<2x384xf32> to vector<2x128xf32>
    %14 = vector.extract_strided_slice %12 {offsets = [0, 128], sizes = [2, 128], strides = [1, 1]} : vector<2x384xf32> to vector<2x128xf32>
    %15 = arith.addf %13, %14 : vector<2x128xf32>
    %16 = vector.extract_strided_slice %12 {offsets = [0, 256], sizes = [2, 128], strides = [1, 1]} : vector<2x384xf32> to vector<2x128xf32>
    %17 = arith.addf %15, %16 : vector<2x128xf32>
    %c0_12 = arith.constant 0 : index
    %c0_13 = arith.constant 0 : index
    %c0_14 = arith.constant 0 : index
    %18 = vector.load %arg6[%c0_12, %c0_13, %c0_14] : memref<3x32x32xf32, #tpu.memory_space<vmem>>, vector<1x32x32xf32>
    %19 = vector.shape_cast %18 : vector<1x32x32xf32> to vector<32x32xf32>
    %cst_15 = arith.constant dense<0.000000e+00> : vector<2x32xf32>
    %20 = tpu.matmul %8, %19, %cst_15 {dimension_numbers = #tpu.dot_dimension_numbers<[1], [0], [0], [1], [0, 0, 1, 1], [], []>} : vector<2x32xf32>, vector<32x32xf32>, vector<2x32xf32> -> vector<2x32xf32>
    %c0_16 = arith.constant 0 : index
    %c0_17 = arith.constant 0 : index
    %c0_18 = arith.constant 0 : index
    %21 = vector.load %arg7[%c0_16, %c0_17, %c0_18] : memref<3x128x32xf32, #tpu.memory_space<vmem>>, vector<1x128x32xf32>
    %22 = vector.shape_cast %21 : vector<1x128x32xf32> to vector<128x32xf32>
    %cst_19 = arith.constant dense<0.000000e+00> : vector<2x32xf32>
    %23 = tpu.matmul %17, %22, %cst_19 {dimension_numbers = #tpu.dot_dimension_numbers<[1], [0], [0], [1], [0, 0, 1, 1], [], []>} : vector<2x128xf32>, vector<128x32xf32>, vector<2x32xf32> -> vector<2x32xf32>
    %24 = arith.addf %20, %23 : vector<2x32xf32>
    %c0_20 = arith.constant 0 : index
    %c0_21 = arith.constant 0 : index
    %c0_22 = arith.constant 0 : index
    %25 = vector.load %arg8[%c0_20, %c0_21, %c0_22] : memref<3x32x32xf32, #tpu.memory_space<vmem>>, vector<1x32x32xf32>
    %26 = vector.shape_cast %25 : vector<1x32x32xf32> to vector<32x32xf32>
    %cst_23 = arith.constant dense<0.000000e+00> : vector<2x32xf32>
    %27 = tpu.matmul %1, %26, %cst_23 {dimension_numbers = #tpu.dot_dimension_numbers<[1], [0], [0], [1], [0, 0, 1, 1], [], []>} : vector<2x32xf32>, vector<32x32xf32>, vector<2x32xf32> -> vector<2x32xf32>
    %28 = arith.addf %24, %27 : vector<2x32xf32>
    %c0_24 = arith.constant 0 : index
    %c0_25 = arith.constant 0 : index
    %c0_26 = arith.constant 0 : index
    %29 = vector.load %arg9[%c0_24, %c0_25, %c0_26] : memref<4x1x32xf32, #tpu.memory_space<vmem>>, vector<1x1x32xf32>
    %30 = vector.shape_cast %29 : vector<1x1x32xf32> to vector<1x32xf32>
    %31 = vector.broadcast %30 : vector<1x32xf32> to vector<2x32xf32>
    %32 = arith.addf %28, %31 : vector<2x32xf32>
    %c1 = arith.constant 1 : index
    %c0_27 = arith.constant 0 : index
    %c0_28 = arith.constant 0 : index
    %33 = vector.load %arg6[%c1, %c0_27, %c0_28] : memref<3x32x32xf32, #tpu.memory_space<vmem>>, vector<1x32x32xf32>
    %34 = vector.shape_cast %33 : vector<1x32x32xf32> to vector<32x32xf32>
    %cst_29 = arith.constant dense<0.000000e+00> : vector<2x32xf32>
    %35 = tpu.matmul %8, %34, %cst_29 {dimension_numbers = #tpu.dot_dimension_numbers<[1], [0], [0], [1], [0, 0, 1, 1], [], []>} : vector<2x32xf32>, vector<32x32xf32>, vector<2x32xf32> -> vector<2x32xf32>
    %c1_30 = arith.constant 1 : index
    %c0_31 = arith.constant 0 : index
    %c0_32 = arith.constant 0 : index
    %36 = vector.load %arg7[%c1_30, %c0_31, %c0_32] : memref<3x128x32xf32, #tpu.memory_space<vmem>>, vector<1x128x32xf32>
    %37 = vector.shape_cast %36 : vector<1x128x32xf32> to vector<128x32xf32>
    %cst_33 = arith.constant dense<0.000000e+00> : vector<2x32xf32>
    %38 = tpu.matmul %17, %37, %cst_33 {dimension_numbers = #tpu.dot_dimension_numbers<[1], [0], [0], [1], [0, 0, 1, 1], [], []>} : vector<2x128xf32>, vector<128x32xf32>, vector<2x32xf32> -> vector<2x32xf32>
    %39 = arith.addf %35, %38 : vector<2x32xf32>
    %c1_34 = arith.constant 1 : index
    %c0_35 = arith.constant 0 : index
    %c0_36 = arith.constant 0 : index
    %40 = vector.load %arg8[%c1_34, %c0_35, %c0_36] : memref<3x32x32xf32, #tpu.memory_space<vmem>>, vector<1x32x32xf32>
    %41 = vector.shape_cast %40 : vector<1x32x32xf32> to vector<32x32xf32>
    %cst_37 = arith.constant dense<0.000000e+00> : vector<2x32xf32>
    %42 = tpu.matmul %1, %41, %cst_37 {dimension_numbers = #tpu.dot_dimension_numbers<[1], [0], [0], [1], [0, 0, 1, 1], [], []>} : vector<2x32xf32>, vector<32x32xf32>, vector<2x32xf32> -> vector<2x32xf32>
    %43 = arith.addf %39, %42 : vector<2x32xf32>
    %c1_38 = arith.constant 1 : index
    %c0_39 = arith.constant 0 : index
    %c0_40 = arith.constant 0 : index
    %44 = vector.load %arg9[%c1_38, %c0_39, %c0_40] : memref<4x1x32xf32, #tpu.memory_space<vmem>>, vector<1x1x32xf32>
    %45 = vector.shape_cast %44 : vector<1x1x32xf32> to vector<1x32xf32>
    %46 = vector.broadcast %45 : vector<1x32xf32> to vector<2x32xf32>
    %47 = arith.addf %43, %46 : vector<2x32xf32>
    %c2 = arith.constant 2 : index
    %c0_41 = arith.constant 0 : index
    %c0_42 = arith.constant 0 : index
    %48 = vector.load %arg6[%c2, %c0_41, %c0_42] : memref<3x32x32xf32, #tpu.memory_space<vmem>>, vector<1x32x32xf32>
    %49 = vector.shape_cast %48 : vector<1x32x32xf32> to vector<32x32xf32>
    %cst_43 = arith.constant dense<0.000000e+00> : vector<2x32xf32>
    %50 = tpu.matmul %8, %49, %cst_43 {dimension_numbers = #tpu.dot_dimension_numbers<[1], [0], [0], [1], [0, 0, 1, 1], [], []>} : vector<2x32xf32>, vector<32x32xf32>, vector<2x32xf32> -> vector<2x32xf32>
    %c2_44 = arith.constant 2 : index
    %c0_45 = arith.constant 0 : index
    %c0_46 = arith.constant 0 : index
    %51 = vector.load %arg7[%c2_44, %c0_45, %c0_46] : memref<3x128x32xf32, #tpu.memory_space<vmem>>, vector<1x128x32xf32>
    %52 = vector.shape_cast %51 : vector<1x128x32xf32> to vector<128x32xf32>
    %cst_47 = arith.constant dense<0.000000e+00> : vector<2x32xf32>
    %53 = tpu.matmul %17, %52, %cst_47 {dimension_numbers = #tpu.dot_dimension_numbers<[1], [0], [0], [1], [0, 0, 1, 1], [], []>} : vector<2x128xf32>, vector<128x32xf32>, vector<2x32xf32> -> vector<2x32xf32>
    %54 = arith.addf %50, %53 : vector<2x32xf32>
    %c2_48 = arith.constant 2 : index
    %c0_49 = arith.constant 0 : index
    %c0_50 = arith.constant 0 : index
    %55 = vector.load %arg9[%c2_48, %c0_49, %c0_50] : memref<4x1x32xf32, #tpu.memory_space<vmem>>, vector<1x1x32xf32>
    %56 = vector.shape_cast %55 : vector<1x1x32xf32> to vector<1x32xf32>
    %57 = vector.broadcast %56 : vector<1x32xf32> to vector<2x32xf32>
    %58 = arith.addf %54, %57 : vector<2x32xf32>
    %c2_51 = arith.constant 2 : index
    %c0_52 = arith.constant 0 : index
    %c0_53 = arith.constant 0 : index
    %59 = vector.load %arg8[%c2_51, %c0_52, %c0_53] : memref<3x32x32xf32, #tpu.memory_space<vmem>>, vector<1x32x32xf32>
    %60 = vector.shape_cast %59 : vector<1x32x32xf32> to vector<32x32xf32>
    %cst_54 = arith.constant dense<0.000000e+00> : vector<2x32xf32>
    %61 = tpu.matmul %1, %60, %cst_54 {dimension_numbers = #tpu.dot_dimension_numbers<[1], [0], [0], [1], [0, 0, 1, 1], [], []>} : vector<2x32xf32>, vector<32x32xf32>, vector<2x32xf32> -> vector<2x32xf32>
    %c3 = arith.constant 3 : index
    %c0_55 = arith.constant 0 : index
    %c0_56 = arith.constant 0 : index
    %62 = vector.load %arg9[%c3, %c0_55, %c0_56] : memref<4x1x32xf32, #tpu.memory_space<vmem>>, vector<1x1x32xf32>
    %63 = vector.shape_cast %62 : vector<1x1x32xf32> to vector<1x32xf32>
    %64 = vector.broadcast %63 : vector<1x32xf32> to vector<2x32xf32>
    %65 = arith.addf %61, %64 : vector<2x32xf32>
    %66 = arith.negf %32 : vector<2x32xf32>
    %67 = math.exp %66 : vector<2x32xf32>
    %cst_57 = arith.constant 1.000000e+00 : f32
    %68 = vector.broadcast %cst_57 : f32 to vector<2x32xf32>
    %69 = arith.addf %68, %67 : vector<2x32xf32>
    %70 = arith.divf %68, %69 : vector<2x32xf32>
    %71 = arith.negf %47 : vector<2x32xf32>
    %72 = math.exp %71 : vector<2x32xf32>
    %cst_58 = arith.constant 1.000000e+00 : f32
    %73 = vector.broadcast %cst_58 : f32 to vector<2x32xf32>
    %74 = arith.addf %73, %72 : vector<2x32xf32>
    %75 = arith.divf %73, %74 : vector<2x32xf32>
    %76 = arith.mulf %70, %65 : vector<2x32xf32>
    %77 = arith.addf %58, %76 : vector<2x32xf32>
    %78 = math.tanh %77 : vector<2x32xf32>
    %cst_59 = arith.constant 1.000000e+00 : f32
    %79 = vector.broadcast %cst_59 : f32 to vector<2x32xf32>
    %80 = arith.subf %79, %75 : vector<2x32xf32>
    %81 = arith.mulf %80, %78 : vector<2x32xf32>
    %82 = arith.mulf %75, %1 : vector<2x32xf32>
    %83 = arith.addf %81, %82 : vector<2x32xf32>
    %c0_60 = arith.constant 0 : index
    %c0_61 = arith.constant 0 : index
    %84 = vector.load %arg10[%c0_60, %c0_61] : memref<32x40xf32, #tpu.memory_space<vmem>>, vector<32x40xf32>
    %cst_62 = arith.constant dense<0.000000e+00> : vector<2x40xf32>
    %85 = tpu.matmul %83, %84, %cst_62 {dimension_numbers = #tpu.dot_dimension_numbers<[1], [0], [0], [1], [0, 0, 1, 1], [], []>} : vector<2x32xf32>, vector<32x40xf32>, vector<2x40xf32> -> vector<2x40xf32>
    %c0_63 = arith.constant 0 : index
    %c0_64 = arith.constant 0 : index
    %86 = vector.load %arg11[%c0_63, %c0_64] : memref<1x40xf32, #tpu.memory_space<vmem>>, vector<1x40xf32>
    %87 = vector.broadcast %86 : vector<1x40xf32> to vector<2x40xf32>
    %88 = arith.addf %85, %87 : vector<2x40xf32>
    %c0_65 = arith.constant 0 : index
    %c0_66 = arith.constant 0 : index
    %89 = vector.load %arg12[%c0_65, %c0_66] : memref<2x40xf32, #tpu.memory_space<vmem>>, vector<2x40xf32>
    tpu.vector_store %arg12[%c0_65, %c0_66], %88 {strides = array<i32>} : memref<2x40xf32, #tpu.memory_space<vmem>>, vector<2x40xf32>,
    return
  }
  func.func @transform_0(%arg0: i32) -> (i32, i32) {
    %c0_i32 = arith.constant 0 : i32
    %c0_i32_0 = arith.constant 0 : i32
    return %arg0, %c0_i32 : i32, i32
  }
  func.func @transform_1(%arg0: i32) -> (i32, i32) {
    %c0_i32 = arith.constant 0 : i32
    %c0_i32_0 = arith.constant 0 : i32
    return %arg0, %c0_i32 : i32, i32
  }
  func.func @transform_2(%arg0: i32) -> (i32, i32) {
    %c0_i32 = arith.constant 0 : i32
    %c0_i32_0 = arith.constant 0 : i32
    %c0_i32_1 = arith.constant 0 : i32
    return %c0_i32, %c0_i32_0 : i32, i32
  }
  func.func @transform_3(%arg0: i32) -> (i32, i32) {
    %c0_i32 = arith.constant 0 : i32
    %c0_i32_0 = arith.constant 0 : i32
    %c0_i32_1 = arith.constant 0 : i32
    return %c0_i32, %c0_i32_0 : i32, i32
  }
  func.func @transform_4(%arg0: i32) -> (i32, i32) {
    %c0_i32 = arith.constant 0 : i32
    %c0_i32_0 = arith.constant 0 : i32
    %c0_i32_1 = arith.constant 0 : i32
    return %c0_i32, %c0_i32_0 : i32, i32
  }
  func.func @transform_5(%arg0: i32) -> (i32, i32, i32) {
    %c0_i32 = arith.constant 0 : i32
    %c0_i32_0 = arith.constant 0 : i32
    %c0_i32_1 = arith.constant 0 : i32
    %c0_i32_2 = arith.constant 0 : i32
    return %c0_i32, %c0_i32_0, %c0_i32_1 : i32, i32, i32
  }
  func.func @transform_6(%arg0: i32) -> (i32, i32, i32) {
    %c0_i32 = arith.constant 0 : i32
    %c0_i32_0 = arith.constant 0 : i32
    %c0_i32_1 = arith.constant 0 : i32
    %c0_i32_2 = arith.constant 0 : i32
    return %c0_i32, %c0_i32_0, %c0_i32_1 : i32, i32, i32
  }
  func.func @transform_7(%arg0: i32) -> (i32, i32, i32) {
    %c0_i32 = arith.constant 0 : i32
    %c0_i32_0 = arith.constant 0 : i32
    %c0_i32_1 = arith.constant 0 : i32
    %c0_i32_2 = arith.constant 0 : i32
    return %c0_i32, %c0_i32_0, %c0_i32_1 : i32, i32, i32
  }
  func.func @transform_8(%arg0: i32) -> (i32, i32, i32) {
    %c0_i32 = arith.constant 0 : i32
    %c0_i32_0 = arith.constant 0 : i32
    %c0_i32_1 = arith.constant 0 : i32
    %c0_i32_2 = arith.constant 0 : i32
    return %c0_i32, %c0_i32_0, %c0_i32_1 : i32, i32, i32
  }
  func.func @transform_9(%arg0: i32) -> (i32, i32) {
    %c0_i32 = arith.constant 0 : i32
    %c0_i32_0 = arith.constant 0 : i32
    %c0_i32_1 = arith.constant 0 : i32
    return %c0_i32, %c0_i32_0 : i32, i32
  }
  func.func @transform_10(%arg0: i32) -> (i32, i32) {
    %c0_i32 = arith.constant 0 : i32
    %c0_i32_0 = arith.constant 0 : i32
    %c0_i32_1 = arith.constant 0 : i32
    return %c0_i32, %c0_i32_0 : i32, i32
  }
  func.func @transform_11(%arg0: i32) -> (i32, i32) {
    %c0_i32 = arith.constant 0 : i32
    %c0_i32_0 = arith.constant 0 : i32
    return %arg0, %c0_i32 : i32, i32
  }
}

</mosaic_0001>

<llo_original>
// kernel: gnn_sum_rnn_agent_forward.1
$region0: #{gnn_sum_rnn_agent_forward.1}
  #allocation0 [shape = 'u32[]', space=smem, size = 0x4, offset = 0x4, fixed_abs, tag = 'smem constant byte address 0x4 - core index']
  #allocation1 [shape = 'u32[144,128]{1,0:T(1,128)}', space=vmem, size = 0x12000, scoped, tag = 'internal scratch']
  %s0 = inlined_call_operand.vmem [shape: f32[2,40], index: 0, kind: input, shape index: {}]
  %s1 = inlined_call_operand.vmem [shape: f32[2,32], index: 1, kind: input, shape index: {}]
  %s2 = inlined_call_operand.vmem [shape: f32[40,32], index: 2, kind: input, shape index: {}]
  %s3 = inlined_call_operand.vmem [shape: f32[1,32], index: 3, kind: input, shape index: {}]
  %s4 = inlined_call_operand.vmem [shape: f32[40,384], index: 4, kind: input, shape index: {}]
  %s5 = inlined_call_operand.vmem [shape: f32[3,32,32], index: 5, kind: input, shape index: {}]
  %s6 = inlined_call_operand.vmem [shape: f32[3,128,32], index: 6, kind: input, shape index: {}]
  %s7 = inlined_call_operand.vmem [shape: f32[3,32,32], index: 7, kind: input, shape index: {}]
  %s8 = inlined_call_operand.vmem [shape: f32[4,1,32], index: 8, kind: input, shape index: {}]
  %s9 = inlined_call_operand.vmem [shape: f32[32,40], index: 9, kind: input, shape index: {}]
  %s10 = inlined_call_operand.vmem [shape: f32[1,40], index: 10, kind: input, shape index: {}]
  %s11 = inlined_call_operand.vmem [shape: f32[2,40], index: 11, kind: output, shape index: {}]
  %s12 = sld [smem:[#allocation0]]
  $region54: #{gnn_sum_rnn_agent_forward.1} parent=0
    _
  %s14 = ssub.s32 1, %s12
  %s15 = scalar_select 0, %s14, %s12
  // Predicated region
  $region2: #{gnn_sum_rnn_agent_forward.1} parent=0 // pred_check
    _
  $region3: #{gnn_sum_rnn_agent_forward.1} parent=0 // pred_check_branch
    %17 = sbr.rel (0) target = $region5
  $region4: #{gnn_sum_rnn_agent_forward.1} parent=0 // pred_region
    _
  $region5: #{gnn_sum_rnn_agent_forward.1} parent=0 // pred_fallthru
    _
  // Predicated region
  $region6: #{gnn_sum_rnn_agent_forward.1} parent=0 // pred_check
    _
  $region7: #{gnn_sum_rnn_agent_forward.1} parent=0 // pred_check_branch
    %19 = sbr.rel (0) target = $region9
  $region8: #{gnn_sum_rnn_agent_forward.1} parent=0 // pred_region
    _
  $region9: #{gnn_sum_rnn_agent_forward.1} parent=0 // pred_fallthru
    _
  // Predicated region
  $region10: #{gnn_sum_rnn_agent_forward.1} parent=0 // pred_check
    _
  $region11: #{gnn_sum_rnn_agent_forward.1} parent=0 // pred_check_branch
    %21 = sbr.rel (0) target = $region13
  $region12: #{gnn_sum_rnn_agent_forward.1} parent=0 // pred_region
    _
  $region13: #{gnn_sum_rnn_agent_forward.1} parent=0 // pred_fallthru
    _
  // Predicated region
  $region14: #{gnn_sum_rnn_agent_forward.1} parent=0 // pred_check
    _
  $region15: #{gnn_sum_rnn_agent_forward.1} parent=0 // pred_check_branch
    %23 = sbr.rel (0) target = $region17
  $region16: #{gnn_sum_rnn_agent_forward.1} parent=0 // pred_region
    _
  $region17: #{gnn_sum_rnn_agent_forward.1} parent=0 // pred_fallthru
    _
  // Predicated region
  $region18: #{gnn_sum_rnn_agent_forward.1} parent=0 // pred_check
    _
  $region19: #{gnn_sum_rnn_agent_forward.1} parent=0 // pred_check_branch
    %25 = sbr.rel (0) target = $region21
  $region20: #{gnn_sum_rnn_agent_forward.1} parent=0 // pred_region
    _
  $region21: #{gnn_sum_rnn_agent_forward.1} parent=0 // pred_fallthru
    _
  // Predicated region
  $region22: #{gnn_sum_rnn_agent_forward.1} parent=0 // pred_check
    _
  $region23: #{gnn_sum_rnn_agent_forward.1} parent=0 // pred_check_branch
    %27 = sbr.rel (0) target = $region25
  $region24: #{gnn_sum_rnn_agent_forward.1} parent=0 // pred_region
    _
  $region25: #{gnn_sum_rnn_agent_forward.1} parent=0 // pred_fallthru
    _
  // Predicated region
  $region26: #{gnn_sum_rnn_agent_forward.1} parent=0 // pred_check
    _
  $region27: #{gnn_sum_rnn_agent_forward.1} parent=0 // pred_check_branch
    %29 = sbr.rel (0) target = $region29
  $region28: #{gnn_sum_rnn_agent_forward.1} parent=0 // pred_region
    _
  $region29: #{gnn_sum_rnn_agent_forward.1} parent=0 // pred_fallthru
    _
  // Predicated region
  $region30: #{gnn_sum_rnn_agent_forward.1} parent=0 // pred_check
    _
  $region31: #{gnn_sum_rnn_agent_forward.1} parent=0 // pred_check_branch
    %31 = sbr.rel (0) target = $region33
  $region32: #{gnn_sum_rnn_agent_forward.1} parent=0 // pred_region
    _
  $region33: #{gnn_sum_rnn_agent_forward.1} parent=0 // pred_fallthru
    _
  // Predicated region
  $region34: #{gnn_sum_rnn_agent_forward.1} parent=0 // pred_check
    _
  $region35: #{gnn_sum_rnn_agent_forward.1} parent=0 // pred_check_branch
    %33 = sbr.rel (0) target = $region37
  $region36: #{gnn_sum_rnn_agent_forward.1} parent=0 // pred_region
    _
  $region37: #{gnn_sum_rnn_agent_forward.1} parent=0 // pred_fallthru
    _
  // Predicated region
  $region38: #{gnn_sum_rnn_agent_forward.1} parent=0 // pred_check
    _
  $region39: #{gnn_sum_rnn_agent_forward.1} parent=0 // pred_check_branch
    %35 = sbr.rel (0) target = $region41
  $region40: #{gnn_sum_rnn_agent_forward.1} parent=0 // pred_region
    _
  $region41: #{gnn_sum_rnn_agent_forward.1} parent=0 // pred_fallthru
    _
  // Predicated region
  $region42: #{gnn_sum_rnn_agent_forward.1} parent=0 // pred_check
    _
  $region43: #{gnn_sum_rnn_agent_forward.1} parent=0 // pred_check_branch
    %37 = sbr.rel (0) target = $region45
  $region44: #{gnn_sum_rnn_agent_forward.1} parent=0 // pred_region
    _
  $region45: #{gnn_sum_rnn_agent_forward.1} parent=0 // pred_fallthru
    _
  %v38 = vld [vmem:[%s0] sm:$0x3]
  %v39 = vld [vmem:[%s1] sm:$0x3]
  %v40 = vld [vmem:[%s2] sm:$0xff]
  %v41 = vld [vmem:[%s2 + $0x8] sm:$0xff]
  %v42 = vld [vmem:[%s2 + $0x10] sm:$0xff]
  %v43 = vld [vmem:[%s2 + $0x18] sm:$0xff]
  %v44 = vld [vmem:[%s2 + $0x20] sm:$0xff]
  %v45 = vld [vmem:[%s3] sm:$0x1]
  %v47 = vlaneseq
  %v48 = vshrl.u32 %v47, 7
  %v49 = vsub.s32 0, %v48
  %v50 = vrot.slane %v45, %v49
  %vm52 = vcmask 326656
  %v54 = vsel %vm52, %v38, 0
  %56 = vmatprep.subr.mxu0 0.0
  %57 = vmatpush1.msra.mxu0 %v40
  %58 = vmatprep.subr.mxu0 0.0
  %59 = vmatpush1.msra.mxu0 %v41
  %60 = vmatprep.subr.mxu0 0.0
  %61 = vmatpush1.msra.mxu0 %v42
  %62 = vmatprep.subr.mxu0 0.0
  %63 = vmatpush1.msra.mxu0 %v43
  %64 = vmatprep.subr.mxu0 0.0
  %65 = vmatpush1.msra.mxu0 %v44
  %66 = vmatprep.subr.mxu0 0.0
  %67 = vmatpush1.msra.mxu0 0.0
  %68 = vmatprep.subr.mxu0 0.0
  %69 = vmatpush1.msra.mxu0 0.0
  %70 = vmatprep.subr.mxu0 0.0
  %71 = vmatpush1.msra.mxu0 0.0
  %72 = vmatprep.subr.mxu0 0.0
  %73 = vmatpush1.msra.mxu0 0.0
  %74 = vmatprep.subr.mxu0 0.0
  %75 = vmatpush1.msra.mxu0 0.0
  %76 = vmatprep.subr.mxu0 0.0
  %77 = vmatpush1.msra.mxu0 0.0
  %78 = vmatprep.subr.mxu0 0.0
  %79 = vmatpush1.msra.mxu0 0.0
  %80 = vmatprep.subr.mxu0 0.0
  %81 = vmatpush1.msra.mxu0 0.0
  %82 = vmatprep.subr.mxu0 0.0
  %83 = vmatpush1.msra.mxu0 0.0
  %84 = vmatprep.subr.mxu0 0.0
  %85 = vmatpush1.msra.mxu0 0.0
  %86 = vmatprep.subr.mxu0 0.0
  %87 = vmatpush1.msra.mxu0 0.0
  %88 = vmatprep.subr.mxu0 0.0
  %89 = vmatpush1.msra.mxu0 0.0
  %90 = vmatprep.subr.mxu0 0.0
  %91 = vmatpush1.msra.mxu0 0.0
  %92 = vmatprep.subr.mxu0 0.0
  %93 = vmatpush1.msra.mxu0 0.0
  %94 = vmatprep.subr.mxu0 0.0
  %95 = vmatpush1.msra.mxu0 0.0
  %96 = vmatprep.subr.mxu0 0.0
  %97 = vmatpush1.msra.mxu0 0.0
  %98 = vmatprep.subr.mxu0 0.0
  %99 = vmatpush1.msra.mxu0 0.0
  %100 = vmatprep.subr.mxu0 0.0
  %101 = vmatpush1.msra.mxu0 0.0
  %102 = vmatprep.subr.mxu0 0.0
  %103 = vmatpush1.msra.mxu0 0.0
  %104 = vmatprep.subr.mxu0 0.0
  %105 = vmatpush1.msra.mxu0 0.0
  %106 = vmatprep.subr.mxu0 0.0
  %107 = vmatpush1.msra.mxu0 0.0
  %108 = vmatprep.subr.mxu0 0.0
  %109 = vmatpush1.msra.mxu0 0.0
  %110 = vmatprep.subr.mxu0 0.0
  %111 = vmatpush1.msra.mxu0 0.0
  %112 = vmatprep.subr.mxu0 0.0
  %113 = vmatpush1.msra.mxu0 0.0
  %114 = vmatprep.subr.mxu0 0.0
  %115 = vmatpush1.msra.mxu0 0.0
  %116 = vmatprep.subr.mxu0 0.0
  %117 = vmatpush1.msra.mxu0 0.0
  %118 = vmatprep.subr.mxu0 0.0
  %119 = vmatpush1.msra.mxu0 0.0
  %120 = vmatprep.mubr.f32.mxu0 0.0
  %121 = vmatmul.mubr.f32.gmra.mrb[0].mxu0 %v54
  %v122 = vpop.f32.mrb[0].mxu0
  %v123 = vadd.f32 %v50, %v122
  %v124 = vpop.f32.mrb[0].mxu0
  %125 = vdwg.mxu0
  %v126 = vmax.f32 %v123, 0.0
  %v127 = vld [vmem:[%s4] sm:$0xff]
  %v128 = vld [vmem:[%s4 + $0x8] sm:$0xff]
  %v129 = vld [vmem:[%s4 + $0x10] sm:$0xff]
  %v130 = vld [vmem:[%s4 + $0x18] sm:$0xff]
  %v131 = vld [vmem:[%s4 + $0x20] sm:$0xff]
  %v132 = vld [vmem:[%s4 + $0x28] sm:$0xff]
  %v133 = vld [vmem:[%s4 + $0x30] sm:$0xff]
  %v134 = vld [vmem:[%s4 + $0x38] sm:$0xff]
  %v135 = vld [vmem:[%s4 + $0x40] sm:$0xff]
  %v136 = vld [vmem:[%s4 + $0x48] sm:$0xff]
  %v137 = vld [vmem:[%s4 + $0x50] sm:$0xff]
  %v138 = vld [vmem:[%s4 + $0x58] sm:$0xff]
  %v139 = vld [vmem:[%s4 + $0x60] sm:$0xff]
  %v140 = vld [vmem:[%s4 + $0x68] sm:$0xff]
  %v141 = vld [vmem:[%s4 + $0x70] sm:$0xff]
  %142 = vmatprep.subr.mxu0 %v128
  %143 = vmatpush1.msra.mxu0 %v127
  %144 = vmatprep.subr.mxu0 %v131
  %145 = vmatpush1.msra.mxu0 %v130
  %146 = vmatprep.subr.mxu0 %v134
  %147 = vmatpush1.msra.mxu0 %v133
  %148 = vmatprep.subr.mxu0 %v137
  %149 = vmatpush1.msra.mxu0 %v136
  %150 = vmatprep.subr.mxu0 %v140
  %151 = vmatpush1.msra.mxu0 %v139
  %152 = vmatprep.subr.mxu0 0.0
  %153 = vmatpush1.msra.mxu0 0.0
  %154 = vmatprep.subr.mxu0 0.0
  %155 = vmatpush1.msra.mxu0 0.0
  %156 = vmatprep.subr.mxu0 0.0
  %157 = vmatpush1.msra.mxu0 0.0
  %158 = vmatprep.subr.mxu0 0.0
  %159 = vmatpush1.msra.mxu0 0.0
  %160 = vmatprep.subr.mxu0 0.0
  %161 = vmatpush1.msra.mxu0 0.0
  %162 = vmatprep.subr.mxu0 0.0
  %163 = vmatpush1.msra.mxu0 0.0
  %164 = vmatprep.subr.mxu0 0.0
  %165 = vmatpush1.msra.mxu0 0.0
  %166 = vmatprep.subr.mxu0 0.0
  %167 = vmatpush1.msra.mxu0 0.0
  %168 = vmatprep.subr.mxu0 0.0
  %169 = vmatpush1.msra.mxu0 0.0
  %170 = vmatprep.subr.mxu0 0.0
  %171 = vmatpush1.msra.mxu0 0.0
  %172 = vmatprep.subr.mxu0 0.0
  %173 = vmatpush1.msra.mxu0 0.0
  %174 = vmatprep.subr.mxu0 0.0
  %175 = vmatpush1.msra.mxu0 0.0
  %176 = vmatprep.subr.mxu0 0.0
  %177 = vmatpush1.msra.mxu0 0.0
  %178 = vmatprep.subr.mxu0 0.0
  %179 = vmatpush1.msra.mxu0 0.0
  %180 = vmatprep.subr.mxu0 0.0
  %181 = vmatpush1.msra.mxu0 0.0
  %182 = vmatprep.subr.mxu0 0.0
  %183 = vmatpush1.msra.mxu0 0.0
  %184 = vmatprep.subr.mxu0 0.0
  %185 = vmatpush1.msra.mxu0 0.0
  %186 = vmatprep.subr.mxu0 0.0
  %187 = vmatpush1.msra.mxu0 0.0
  %188 = vmatprep.subr.mxu0 0.0
  %189 = vmatpush1.msra.mxu0 0.0
  %190 = vmatprep.subr.mxu0 0.0
  %191 = vmatpush1.msra.mxu0 0.0
  %192 = vmatprep.subr.mxu0 0.0
  %193 = vmatpush1.msra.mxu0 0.0
  %194 = vmatprep.subr.mxu0 0.0
  %195 = vmatpush1.msra.mxu0 0.0
  %196 = vmatprep.subr.mxu0 0.0
  %197 = vmatpush1.msra.mxu0 0.0
  %198 = vmatprep.subr.mxu0 0.0
  %199 = vmatpush1.msra.mxu0 0.0
  %200 = vmatprep.subr.mxu0 0.0
  %201 = vmatpush1.msra.mxu0 0.0
  %202 = vmatprep.subr.mxu0 0.0
  %203 = vmatpush1.msra.mxu0 0.0
  %204 = vmatprep.subr.mxu0 0.0
  %205 = vmatpush1.msra.mxu0 0.0
  %206 = vmatprep.mubr.f32.mxu0 0.0
  %207 = vmatmul.mubr.f32.gmra.mrb[0].mxu0 %v54
  %v208 = vpop.f32.mrb[0].mxu0
  %v209 = vadd.f32 0.0, %v208
  %v210 = vpop.f32.mrb[0].mxu0
  %v211 = vadd.f32 0.0, %v210
  %212 = vdwg.mxu0
  %213 = vmatprep.subr.mxu0 0.0
  %214 = vmatpush1.msra.mxu0 %v129
  %215 = vmatprep.subr.mxu0 0.0
  %216 = vmatpush1.msra.mxu0 %v132
  %217 = vmatprep.subr.mxu0 0.0
  %218 = vmatpush1.msra.mxu0 %v135
  %219 = vmatprep.subr.mxu0 0.0
  %220 = vmatpush1.msra.mxu0 %v138
  %221 = vmatprep.subr.mxu0 0.0
  %222 = vmatpush1.msra.mxu0 %v141
  %223 = vmatprep.subr.mxu0 0.0
  %224 = vmatpush1.msra.mxu0 0.0
  %225 = vmatprep.subr.mxu0 0.0
  %226 = vmatpush1.msra.mxu0 0.0
  %227 = vmatprep.subr.mxu0 0.0
  %228 = vmatpush1.msra.mxu0 0.0
  %229 = vmatprep.subr.mxu0 0.0
  %230 = vmatpush1.msra.mxu0 0.0
  %231 = vmatprep.subr.mxu0 0.0
  %232 = vmatpush1.msra.mxu0 0.0
  %233 = vmatprep.subr.mxu0 0.0
  %234 = vmatpush1.msra.mxu0 0.0
  %235 = vmatprep.subr.mxu0 0.0
  %236 = vmatpush1.msra.mxu0 0.0
  %237 = vmatprep.subr.mxu0 0.0
  %238 = vmatpush1.msra.mxu0 0.0
  %239 = vmatprep.subr.mxu0 0.0
  %240 = vmatpush1.msra.mxu0 0.0
  %241 = vmatprep.subr.mxu0 0.0
  %242 = vmatpush1.msra.mxu0 0.0
  %243 = vmatprep.subr.mxu0 0.0
  %244 = vmatpush1.msra.mxu0 0.0
  %245 = vmatprep.subr.mxu0 0.0
  %246 = vmatpush1.msra.mxu0 0.0
  %247 = vmatprep.subr.mxu0 0.0
  %248 = vmatpush1.msra.mxu0 0.0
  %249 = vmatprep.subr.mxu0 0.0
  %250 = vmatpush1.msra.mxu0 0.0
  %251 = vmatprep.subr.mxu0 0.0
  %252 = vmatpush1.msra.mxu0 0.0
  %253 = vmatprep.subr.mxu0 0.0
  %254 = vmatpush1.msra.mxu0 0.0
  %255 = vmatprep.subr.mxu0 0.0
  %256 = vmatpush1.msra.mxu0 0.0
  %257 = vmatprep.subr.mxu0 0.0
  %258 = vmatpush1.msra.mxu0 0.0
  %259 = vmatprep.subr.mxu0 0.0
  %260 = vmatpush1.msra.mxu0 0.0
  %261 = vmatprep.subr.mxu0 0.0
  %262 = vmatpush1.msra.mxu0 0.0
  %263 = vmatprep.subr.mxu0 0.0
  %264 = vmatpush1.msra.mxu0 0.0
  %265 = vmatprep.subr.mxu0 0.0
  %266 = vmatpush1.msra.mxu0 0.0
  %267 = vmatprep.subr.mxu0 0.0
  %268 = vmatpush1.msra.mxu0 0.0
  %269 = vmatprep.subr.mxu0 0.0
  %270 = vmatpush1.msra.mxu0 0.0
  %271 = vmatprep.subr.mxu0 0.0
  %272 = vmatpush1.msra.mxu0 0.0
  %273 = vmatprep.subr.mxu0 0.0
  %274 = vmatpush1.msra.mxu0 0.0
  %275 = vmatprep.subr.mxu0 0.0
  %276 = vmatpush1.msra.mxu0 0.0
  %277 = vmatprep.mubr.f32.mxu0 0.0
  %278 = vmatmul.mubr.f32.gmra.mrb[0].mxu0 %v54
  %v279 = vpop.f32.mrb[0].mxu0
  %v280 = vadd.f32 0.0, %v279
  %v281 = vpop.f32.mrb[0].mxu0
  %282 = vdwg.mxu0
  %v283 = vmax.f32 %v209, 0.0
  %v284 = vmax.f32 %v211, 0.0
  %v285 = vmax.f32 %v280, 0.0
  %v286 = vadd.f32 %v283, %v284
  %v287 = vadd.f32 %v286, %v285
  %v288 = vld [vmem:[%s5] sm:$0xff]
  %v289 = vld [vmem:[%s5 + $0x8] sm:$0xff]
  %v290 = vld [vmem:[%s5 + $0x10] sm:$0xff]
  %v291 = vld [vmem:[%s5 + $0x18] sm:$0xff]
  %v292 = vld [vmem:[%s6] sm:$0xff]
  %v293 = vld [vmem:[%s6 + $0x8] sm:$0xff]
  %v294 = vld [vmem:[%s6 + $0x10] sm:$0xff]
  %v295 = vld [vmem:[%s6 + $0x18] sm:$0xff]
  %v296 = vld [vmem:[%s6 + $0x20] sm:$0xff]
  %v297 = vld [vmem:[%s6 + $0x28] sm:$0xff]
  %v298 = vld [vmem:[%s6 + $0x30] sm:$0xff]
  %v299 = vld [vmem:[%s6 + $0x38] sm:$0xff]
  %v300 = vld [vmem:[%s6 + $0x40] sm:$0xff]
  %v301 = vld [vmem:[%s6 + $0x48] sm:$0xff]
  %v302 = vld [vmem:[%s6 + $0x50] sm:$0xff]
  %v303 = vld [vmem:[%s6 + $0x58] sm:$0xff]
  %v304 = vld [vmem:[%s6 + $0x60] sm:$0xff]
  %v305 = vld [vmem:[%s6 + $0x68] sm:$0xff]
  %v306 = vld [vmem:[%s6 + $0x70] sm:$0xff]
  %v307 = vld [vmem:[%s6 + $0x78] sm:$0xff]
  %308 = vmatprep.subr.mxu0 0.0
  %309 = vmatpush1.msra.mxu0 %v292
  %310 = vmatprep.subr.mxu0 0.0
  %311 = vmatpush1.msra.mxu0 %v293
  %312 = vmatprep.subr.mxu0 0.0
  %313 = vmatpush1.msra.mxu0 %v294
  %314 = vmatprep.subr.mxu0 0.0
  %315 = vmatpush1.msra.mxu0 %v295
  %316 = vmatprep.subr.mxu0 0.0
  %317 = vmatpush1.msra.mxu0 %v296
  %318 = vmatprep.subr.mxu0 0.0
  %319 = vmatpush1.msra.mxu0 %v297
  %320 = vmatprep.subr.mxu0 0.0
  %321 = vmatpush1.msra.mxu0 %v298
  %322 = vmatprep.subr.mxu0 0.0
  %323 = vmatpush1.msra.mxu0 %v299
  %324 = vmatprep.subr.mxu0 0.0
  %325 = vmatpush1.msra.mxu0 %v300
  %326 = vmatprep.subr.mxu0 0.0
  %327 = vmatpush1.msra.mxu0 %v301
  %328 = vmatprep.subr.mxu0 0.0
  %329 = vmatpush1.msra.mxu0 %v302
  %330 = vmatprep.subr.mxu0 0.0
  %331 = vmatpush1.msra.mxu0 %v303
  %332 = vmatprep.subr.mxu0 0.0
  %333 = vmatpush1.msra.mxu0 %v304
  %334 = vmatprep.subr.mxu0 0.0
  %335 = vmatpush1.msra.mxu0 %v305
  %336 = vmatprep.subr.mxu0 0.0
  %337 = vmatpush1.msra.mxu0 %v306
  %338 = vmatprep.subr.mxu0 0.0
  %339 = vmatpush1.msra.mxu0 %v307
  %340 = vmatprep.subr.mxu0 0.0
  %341 = vmatpush1.msra.mxu0 0.0
  %342 = vmatprep.subr.mxu0 0.0
  %343 = vmatpush1.msra.mxu0 0.0
  %344 = vmatprep.subr.mxu0 0.0
  %345 = vmatpush1.msra.mxu0 0.0
  %346 = vmatprep.subr.mxu0 0.0
  %347 = vmatpush1.msra.mxu0 0.0
  %348 = vmatprep.subr.mxu0 0.0
  %349 = vmatpush1.msra.mxu0 0.0
  %350 = vmatprep.subr.mxu0 0.0
  %351 = vmatpush1.msra.mxu0 0.0
  %352 = vmatprep.subr.mxu0 0.0
  %353 = vmatpush1.msra.mxu0 0.0
  %354 = vmatprep.subr.mxu0 0.0
  %355 = vmatpush1.msra.mxu0 0.0
  %356 = vmatprep.subr.mxu0 0.0
  %357 = vmatpush1.msra.mxu0 0.0
  %358 = vmatprep.subr.mxu0 0.0
  %359 = vmatpush1.msra.mxu0 0.0
  %360 = vmatprep.subr.mxu0 0.0
  %361 = vmatpush1.msra.mxu0 0.0
  %362 = vmatprep.subr.mxu0 0.0
  %363 = vmatpush1.msra.mxu0 0.0
  %364 = vmatprep.subr.mxu0 0.0
  %365 = vmatpush1.msra.mxu0 0.0
  %366 = vmatprep.subr.mxu0 0.0
  %367 = vmatpush1.msra.mxu0 0.0
  %368 = vmatprep.subr.mxu0 0.0
  %369 = vmatpush1.msra.mxu0 0.0
  %370 = vmatprep.subr.mxu0 0.0
  %371 = vmatpush1.msra.mxu0 0.0
  %372 = vmatprep.mubr.f32.mxu0 0.0
  %373 = vmatmul.mubr.f32.gmra.mrb[0].mxu0 %v287
  %v374 = vpop.f32.mrb[0].mxu0
  %v375 = vadd.f32 0.0, %v374
  %v376 = vpop.f32.mrb[0].mxu0
  %377 = vdwg.mxu0
  %vm378 = vcmask 261120
  %v380 = vsel %vm378, %v126, 0
  %382 = vmatprep.subr.mxu0 0.0
  %383 = vmatpush1.msra.mxu0 %v288
  %384 = vmatprep.subr.mxu0 0.0
  %385 = vmatpush1.msra.mxu0 %v289
  %386 = vmatprep.subr.mxu0 0.0
  %387 = vmatpush1.msra.mxu0 %v290
  %388 = vmatprep.subr.mxu0 0.0
  %389 = vmatpush1.msra.mxu0 %v291
  %390 = vmatprep.subr.mxu0 0.0
  %391 = vmatpush1.msra.mxu0 0.0
  %392 = vmatprep.subr.mxu0 0.0
  %393 = vmatpush1.msra.mxu0 0.0
  %394 = vmatprep.subr.mxu0 0.0
  %395 = vmatpush1.msra.mxu0 0.0
  %396 = vmatprep.subr.mxu0 0.0
  %397 = vmatpush1.msra.mxu0 0.0
  %398 = vmatprep.subr.mxu0 0.0
  %399 = vmatpush1.msra.mxu0 0.0
  %400 = vmatprep.subr.mxu0 0.0
  %401 = vmatpush1.msra.mxu0 0.0
  %402 = vmatprep.subr.mxu0 0.0
  %403 = vmatpush1.msra.mxu0 0.0
  %404 = vmatprep.subr.mxu0 0.0
  %405 = vmatpush1.msra.mxu0 0.0
  %406 = vmatprep.subr.mxu0 0.0
  %407 = vmatpush1.msra.mxu0 0.0
  %408 = vmatprep.subr.mxu0 0.0
  %409 = vmatpush1.msra.mxu0 0.0
  %410 = vmatprep.subr.mxu0 0.0
  %411 = vmatpush1.msra.mxu0 0.0
  %412 = vmatprep.subr.mxu0 0.0
  %413 = vmatpush1.msra.mxu0 0.0
  %414 = vmatprep.subr.mxu0 0.0
  %415 = vmatpush1.msra.mxu0 0.0
  %416 = vmatprep.subr.mxu0 0.0
  %417 = vmatpush1.msra.mxu0 0.0
  %418 = vmatprep.subr.mxu0 0.0
  %419 = vmatpush1.msra.mxu0 0.0
  %420 = vmatprep.subr.mxu0 0.0
  %421 = vmatpush1.msra.mxu0 0.0
  %422 = vmatprep.subr.mxu0 0.0
  %423 = vmatpush1.msra.mxu0 0.0
  %424 = vmatprep.subr.mxu0 0.0
  %425 = vmatpush1.msra.mxu0 0.0
  %426 = vmatprep.subr.mxu0 0.0
  %427 = vmatpush1.msra.mxu0 0.0
  %428 = vmatprep.subr.mxu0 0.0
  %429 = vmatpush1.msra.mxu0 0.0
  %430 = vmatprep.subr.mxu0 0.0
  %431 = vmatpush1.msra.mxu0 0.0
  %432 = vmatprep.subr.mxu0 0.0
  %433 = vmatpush1.msra.mxu0 0.0
  %434 = vmatprep.subr.mxu0 0.0
  %435 = vmatpush1.msra.mxu0 0.0
  %436 = vmatprep.subr.mxu0 0.0
  %437 = vmatpush1.msra.mxu0 0.0
  %438 = vmatprep.subr.mxu0 0.0
  %439 = vmatpush1.msra.mxu0 0.0
  %440 = vmatprep.subr.mxu0 0.0
  %441 = vmatpush1.msra.mxu0 0.0
  %442 = vmatprep.subr.mxu0 0.0
  %443 = vmatpush1.msra.mxu0 0.0
  %444 = vmatprep.subr.mxu0 0.0
  %445 = vmatpush1.msra.mxu0 0.0
  %446 = vmatprep.mubr.f32.mxu0 0.0
  %447 = vmatmul.mubr.f32.gmra.mrb[0].mxu0 %v380
  %v448 = vpop.f32.mrb[0].mxu0
  %v449 = vadd.f32 %v375, %v448
  %v450 = vpop.f32.mrb[0].mxu0
  %451 = vdwg.mxu0
  %v452 = vld [vmem:[%s7] sm:$0xff]
  %v453 = vld [vmem:[%s7 + $0x8] sm:$0xff]
  %v454 = vld [vmem:[%s7 + $0x10] sm:$0xff]
  %v455 = vld [vmem:[%s7 + $0x18] sm:$0xff]
  %v457 = vsel %vm378, %v39, 0
  %459 = vmatprep.subr.mxu0 0.0
  %460 = vmatpush1.msra.mxu0 %v452
  %461 = vmatprep.subr.mxu0 0.0
  %462 = vmatpush1.msra.mxu0 %v453
  %463 = vmatprep.subr.mxu0 0.0
  %464 = vmatpush1.msra.mxu0 %v454
  %465 = vmatprep.subr.mxu0 0.0
  %466 = vmatpush1.msra.mxu0 %v455
  %467 = vmatprep.subr.mxu0 0.0
  %468 = vmatpush1.msra.mxu0 0.0
  %469 = vmatprep.subr.mxu0 0.0
  %470 = vmatpush1.msra.mxu0 0.0
  %471 = vmatprep.subr.mxu0 0.0
  %472 = vmatpush1.msra.mxu0 0.0
  %473 = vmatprep.subr.mxu0 0.0
  %474 = vmatpush1.msra.mxu0 0.0
  %475 = vmatprep.subr.mxu0 0.0
  %476 = vmatpush1.msra.mxu0 0.0
  %477 = vmatprep.subr.mxu0 0.0
  %478 = vmatpush1.msra.mxu0 0.0
  %479 = vmatprep.subr.mxu0 0.0
  %480 = vmatpush1.msra.mxu0 0.0
  %481 = vmatprep.subr.mxu0 0.0
  %482 = vmatpush1.msra.mxu0 0.0
  %483 = vmatprep.subr.mxu0 0.0
  %484 = vmatpush1.msra.mxu0 0.0
  %485 = vmatprep.subr.mxu0 0.0
  %486 = vmatpush1.msra.mxu0 0.0
  %487 = vmatprep.subr.mxu0 0.0
  %488 = vmatpush1.msra.mxu0 0.0
  %489 = vmatprep.subr.mxu0 0.0
  %490 = vmatpush1.msra.mxu0 0.0
  %491 = vmatprep.subr.mxu0 0.0
  %492 = vmatpush1.msra.mxu0 0.0
  %493 = vmatprep.subr.mxu0 0.0
  %494 = vmatpush1.msra.mxu0 0.0
  %495 = vmatprep.subr.mxu0 0.0
  %496 = vmatpush1.msra.mxu0 0.0
  %497 = vmatprep.subr.mxu0 0.0
  %498 = vmatpush1.msra.mxu0 0.0
  %499 = vmatprep.subr.mxu0 0.0
  %500 = vmatpush1.msra.mxu0 0.0
  %501 = vmatprep.subr.mxu0 0.0
  %502 = vmatpush1.msra.mxu0 0.0
  %503 = vmatprep.subr.mxu0 0.0
  %504 = vmatpush1.msra.mxu0 0.0
  %505 = vmatprep.subr.mxu0 0.0
  %506 = vmatpush1.msra.mxu0 0.0
  %507 = vmatprep.subr.mxu0 0.0
  %508 = vmatpush1.msra.mxu0 0.0
  %509 = vmatprep.subr.mxu0 0.0
  %510 = vmatpush1.msra.mxu0 0.0
  %511 = vmatprep.subr.mxu0 0.0
  %512 = vmatpush1.msra.mxu0 0.0
  %513 = vmatprep.subr.mxu0 0.0
  %514 = vmatpush1.msra.mxu0 0.0
  %515 = vmatprep.subr.mxu0 0.0
  %516 = vmatpush1.msra.mxu0 0.0
  %517 = vmatprep.subr.mxu0 0.0
  %518 = vmatpush1.msra.mxu0 0.0
  %519 = vmatprep.subr.mxu0 0.0
  %520 = vmatpush1.msra.mxu0 0.0
  %521 = vmatprep.subr.mxu0 0.0
  %522 = vmatpush1.msra.mxu0 0.0
  %523 = vmatprep.mubr.f32.mxu0 0.0
  %524 = vmatmul.mubr.f32.gmra.mrb[0].mxu0 %v457
  %v525 = vpop.f32.mrb[0].mxu0
  %v526 = vadd.f32 0.0, %v525
  %v527 = vpop.f32.mrb[0].mxu0
  %528 = vdwg.mxu0
  %v529 = vadd.f32 %v449, %v526
  %v530 = vld [vmem:[%s8] sm:$0x1]
  %v532 = vlaneseq
  %v533 = vshrl.u32 %v532, 7
  %v534 = vsub.s32 0, %v533
  %v535 = vrot.slane %v530, %v534
  %v537 = vadd.f32 %v529, %v535
  %s538 = scalar_lea.vmem %s5, 32
  %v539 = vld [vmem:[%s538] sm:$0xff]
  %v540 = vld [vmem:[%s538 + $0x8] sm:$0xff]
  %v541 = vld [vmem:[%s538 + $0x10] sm:$0xff]
  %v542 = vld [vmem:[%s538 + $0x18] sm:$0xff]
  %s543 = scalar_lea.vmem %s6, 128
  %v544 = vld [vmem:[%s543] sm:$0xff]
  %v545 = vld [vmem:[%s543 + $0x8] sm:$0xff]
  %v546 = vld [vmem:[%s543 + $0x10] sm:$0xff]
  %v547 = vld [vmem:[%s543 + $0x18] sm:$0xff]
  %v548 = vld [vmem:[%s543 + $0x20] sm:$0xff]
  %v549 = vld [vmem:[%s543 + $0x28] sm:$0xff]
  %v550 = vld [vmem:[%s543 + $0x30] sm:$0xff]
  %v551 = vld [vmem:[%s543 + $0x38] sm:$0xff]
  %v552 = vld [vmem:[%s543 + $0x40] sm:$0xff]
  %v553 = vld [vmem:[%s543 + $0x48] sm:$0xff]
  %v554 = vld [vmem:[%s543 + $0x50] sm:$0xff]
  %v555 = vld [vmem:[%s543 + $0x58] sm:$0xff]
  %v556 = vld [vmem:[%s543 + $0x60] sm:$0xff]
  %v557 = vld [vmem:[%s543 + $0x68] sm:$0xff]
  %v558 = vld [vmem:[%s543 + $0x70] sm:$0xff]
  %v559 = vld [vmem:[%s543 + $0x78] sm:$0xff]
  %560 = vmatprep.subr.mxu0 0.0
  %561 = vmatpush1.msra.mxu0 %v544
  %562 = vmatprep.subr.mxu0 0.0
  %563 = vmatpush1.msra.mxu0 %v545
  %564 = vmatprep.subr.mxu0 0.0
  %565 = vmatpush1.msra.mxu0 %v546
  %566 = vmatprep.subr.mxu0 0.0
  %567 = vmatpush1.msra.mxu0 %v547
  %568 = vmatprep.subr.mxu0 0.0
  %569 = vmatpush1.msra.mxu0 %v548
  %570 = vmatprep.subr.mxu0 0.0
  %571 = vmatpush1.msra.mxu0 %v549
  %572 = vmatprep.subr.mxu0 0.0
  %573 = vmatpush1.msra.mxu0 %v550
  %574 = vmatprep.subr.mxu0 0.0
  %575 = vmatpush1.msra.mxu0 %v551
  %576 = vmatprep.subr.mxu0 0.0
  %577 = vmatpush1.msra.mxu0 %v552
  %578 = vmatprep.subr.mxu0 0.0
  %579 = vmatpush1.msra.mxu0 %v553
  %580 = vmatprep.subr.mxu0 0.0
  %581 = vmatpush1.msra.mxu0 %v554
  %582 = vmatprep.subr.mxu0 0.0
  %583 = vmatpush1.msra.mxu0 %v555
  %584 = vmatprep.subr.mxu0 0.0
  %585 = vmatpush1.msra.mxu0 %v556
  %586 = vmatprep.subr.mxu0 0.0
  %587 = vmatpush1.msra.mxu0 %v557
  %588 = vmatprep.subr.mxu0 0.0
  %589 = vmatpush1.msra.mxu0 %v558
  %590 = vmatprep.subr.mxu0 0.0
  %591 = vmatpush1.msra.mxu0 %v559
  %592 = vmatprep.subr.mxu0 0.0
  %593 = vmatpush1.msra.mxu0 0.0
  %594 = vmatprep.subr.mxu0 0.0
  %595 = vmatpush1.msra.mxu0 0.0
  %596 = vmatprep.subr.mxu0 0.0
  %597 = vmatpush1.msra.mxu0 0.0
  %598 = vmatprep.subr.mxu0 0.0
  %599 = vmatpush1.msra.mxu0 0.0
  %600 = vmatprep.subr.mxu0 0.0
  %601 = vmatpush1.msra.mxu0 0.0
  %602 = vmatprep.subr.mxu0 0.0
  %603 = vmatpush1.msra.mxu0 0.0
  %604 = vmatprep.subr.mxu0 0.0
  %605 = vmatpush1.msra.mxu0 0.0
  %606 = vmatprep.subr.mxu0 0.0
  %607 = vmatpush1.msra.mxu0 0.0
  %608 = vmatprep.subr.mxu0 0.0
  %609 = vmatpush1.msra.mxu0 0.0
  %610 = vmatprep.subr.mxu0 0.0
  %611 = vmatpush1.msra.mxu0 0.0
  %612 = vmatprep.subr.mxu0 0.0
  %613 = vmatpush1.msra.mxu0 0.0
  %614 = vmatprep.subr.mxu0 0.0
  %615 = vmatpush1.msra.mxu0 0.0
  %616 = vmatprep.subr.mxu0 0.0
  %617 = vmatpush1.msra.mxu0 0.0
  %618 = vmatprep.subr.mxu0 0.0
  %619 = vmatpush1.msra.mxu0 0.0
  %620 = vmatprep.subr.mxu0 0.0
  %621 = vmatpush1.msra.mxu0 0.0
  %622 = vmatprep.subr.mxu0 0.0
  %623 = vmatpush1.msra.mxu0 0.0
  %624 = vmatprep.mubr.f32.mxu0 0.0
  %625 = vmatmul.mubr.f32.gmra.mrb[0].mxu0 %v287
  %v626 = vpop.f32.mrb[0].mxu0
  %v627 = vadd.f32 0.0, %v626
  %v628 = vpop.f32.mrb[0].mxu0
  %629 = vdwg.mxu0
  %630 = vmatprep.subr.mxu0 0.0
  %631 = vmatpush1.msra.mxu0 %v539
  %632 = vmatprep.subr.mxu0 0.0
  %633 = vmatpush1.msra.mxu0 %v540
  %634 = vmatprep.subr.mxu0 0.0
  %635 = vmatpush1.msra.mxu0 %v541
  %636 = vmatprep.subr.mxu0 0.0
  %637 = vmatpush1.msra.mxu0 %v542
  %638 = vmatprep.subr.mxu0 0.0
  %639 = vmatpush1.msra.mxu0 0.0
  %640 = vmatprep.subr.mxu0 0.0
  %641 = vmatpush1.msra.mxu0 0.0
  %642 = vmatprep.subr.mxu0 0.0
  %643 = vmatpush1.msra.mxu0 0.0
  %644 = vmatprep.subr.mxu0 0.0
  %645 = vmatpush1.msra.mxu0 0.0
  %646 = vmatprep.subr.mxu0 0.0
  %647 = vmatpush1.msra.mxu0 0.0
  %648 = vmatprep.subr.mxu0 0.0
  %649 = vmatpush1.msra.mxu0 0.0
  %650 = vmatprep.subr.mxu0 0.0
  %651 = vmatpush1.msra.mxu0 0.0
  %652 = vmatprep.subr.mxu0 0.0
  %653 = vmatpush1.msra.mxu0 0.0
  %654 = vmatprep.subr.mxu0 0.0
  %655 = vmatpush1.msra.mxu0 0.0
  %656 = vmatprep.subr.mxu0 0.0
  %657 = vmatpush1.msra.mxu0 0.0
  %658 = vmatprep.subr.mxu0 0.0
  %659 = vmatpush1.msra.mxu0 0.0
  %660 = vmatprep.subr.mxu0 0.0
  %661 = vmatpush1.msra.mxu0 0.0
  %662 = vmatprep.subr.mxu0 0.0
  %663 = vmatpush1.msra.mxu0 0.0
  %664 = vmatprep.subr.mxu0 0.0
  %665 = vmatpush1.msra.mxu0 0.0
  %666 = vmatprep.subr.mxu0 0.0
  %667 = vmatpush1.msra.mxu0 0.0
  %668 = vmatprep.subr.mxu0 0.0
  %669 = vmatpush1.msra.mxu0 0.0
  %670 = vmatprep.subr.mxu0 0.0
  %671 = vmatpush1.msra.mxu0 0.0
  %672 = vmatprep.subr.mxu0 0.0
  %673 = vmatpush1.msra.mxu0 0.0
  %674 = vmatprep.subr.mxu0 0.0
  %675 = vmatpush1.msra.mxu0 0.0
  %676 = vmatprep.subr.mxu0 0.0
  %677 = vmatpush1.msra.mxu0 0.0
  %678 = vmatprep.subr.mxu0 0.0
  %679 = vmatpush1.msra.mxu0 0.0
  %680 = vmatprep.subr.mxu0 0.0
  %681 = vmatpush1.msra.mxu0 0.0
  %682 = vmatprep.subr.mxu0 0.0
  %683 = vmatpush1.msra.mxu0 0.0
  %684 = vmatprep.subr.mxu0 0.0
  %685 = vmatpush1.msra.mxu0 0.0
  %686 = vmatprep.subr.mxu0 0.0
  %687 = vmatpush1.msra.mxu0 0.0
  %688 = vmatprep.subr.mxu0 0.0
  %689 = vmatpush1.msra.mxu0 0.0
  %690 = vmatprep.subr.mxu0 0.0
  %691 = vmatpush1.msra.mxu0 0.0
  %692 = vmatprep.subr.mxu0 0.0
  %693 = vmatpush1.msra.mxu0 0.0
  %694 = vmatprep.mubr.f32.mxu0 0.0
  %695 = vmatmul.mubr.f32.gmra.mrb[0].mxu0 %v380
  %v696 = vpop.f32.mrb[0].mxu0
  %v697 = vadd.f32 %v627, %v696
  %v698 = vpop.f32.mrb[0].mxu0
  %699 = vdwg.mxu0
  %s700 = scalar_lea.vmem %s7, 32
  %v701 = vld [vmem:[%s700] sm:$0xff]
  %v702 = vld [vmem:[%s700 + $0x8] sm:$0xff]
  %v703 = vld [vmem:[%s700 + $0x10] sm:$0xff]
  %v704 = vld [vmem:[%s700 + $0x18] sm:$0xff]
  %705 = vmatprep.subr.mxu0 0.0
  %706 = vmatpush1.msra.mxu0 %v701
  %707 = vmatprep.subr.mxu0 0.0
  %708 = vmatpush1.msra.mxu0 %v702
  %709 = vmatprep.subr.mxu0 0.0
  %710 = vmatpush1.msra.mxu0 %v703
  %711 = vmatprep.subr.mxu0 0.0
  %712 = vmatpush1.msra.mxu0 %v704
  %713 = vmatprep.subr.mxu0 0.0
  %714 = vmatpush1.msra.mxu0 0.0
  %715 = vmatprep.subr.mxu0 0.0
  %716 = vmatpush1.msra.mxu0 0.0
  %717 = vmatprep.subr.mxu0 0.0
  %718 = vmatpush1.msra.mxu0 0.0
  %719 = vmatprep.subr.mxu0 0.0
  %720 = vmatpush1.msra.mxu0 0.0
  %721 = vmatprep.subr.mxu0 0.0
  %722 = vmatpush1.msra.mxu0 0.0
  %723 = vmatprep.subr.mxu0 0.0
  %724 = vmatpush1.msra.mxu0 0.0
  %725 = vmatprep.subr.mxu0 0.0
  %726 = vmatpush1.msra.mxu0 0.0
  %727 = vmatprep.subr.mxu0 0.0
  %728 = vmatpush1.msra.mxu0 0.0
  %729 = vmatprep.subr.mxu0 0.0
  %730 = vmatpush1.msra.mxu0 0.0
  %731 = vmatprep.subr.mxu0 0.0
  %732 = vmatpush1.msra.mxu0 0.0
  %733 = vmatprep.subr.mxu0 0.0
  %734 = vmatpush1.msra.mxu0 0.0
  %735 = vmatprep.subr.mxu0 0.0
  %736 = vmatpush1.msra.mxu0 0.0
  %737 = vmatprep.subr.mxu0 0.0
  %738 = vmatpush1.msra.mxu0 0.0
  %739 = vmatprep.subr.mxu0 0.0
  %740 = vmatpush1.msra.mxu0 0.0
  %741 = vmatprep.subr.mxu0 0.0
  %742 = vmatpush1.msra.mxu0 0.0
  %743 = vmatprep.subr.mxu0 0.0
  %744 = vmatpush1.msra.mxu0 0.0
  %745 = vmatprep.subr.mxu0 0.0
  %746 = vmatpush1.msra.mxu0 0.0
  %747 = vmatprep.subr.mxu0 0.0
  %748 = vmatpush1.msra.mxu0 0.0
  %749 = vmatprep.subr.mxu0 0.0
  %750 = vmatpush1.msra.mxu0 0.0
  %751 = vmatprep.subr.mxu0 0.0
  %752 = vmatpush1.msra.mxu0 0.0
  %753 = vmatprep.subr.mxu0 0.0
  %754 = vmatpush1.msra.mxu0 0.0
  %755 = vmatprep.subr.mxu0 0.0
  %756 = vmatpush1.msra.mxu0 0.0
  %757 = vmatprep.subr.mxu0 0.0
  %758 = vmatpush1.msra.mxu0 0.0
  %759 = vmatprep.subr.mxu0 0.0
  %760 = vmatpush1.msra.mxu0 0.0
  %761 = vmatprep.subr.mxu0 0.0
  %762 = vmatpush1.msra.mxu0 0.0
  %763 = vmatprep.subr.mxu0 0.0
  %764 = vmatpush1.msra.mxu0 0.0
  %765 = vmatprep.subr.mxu0 0.0
  %766 = vmatpush1.msra.mxu0 0.0
  %767 = vmatprep.subr.mxu0 0.0
  %768 = vmatpush1.msra.mxu0 0.0
  %769 = vmatprep.mubr.f32.mxu0 0.0
  %770 = vmatmul.mubr.f32.gmra.mrb[0].mxu0 %v457
  %v771 = vpop.f32.mrb[0].mxu0
  %v772 = vadd.f32 0.0, %v771
  %v773 = vpop.f32.mrb[0].mxu0
  %774 = vdwg.mxu0
  %v775 = vadd.f32 %v697, %v772
  %s776 = scalar_lea.vmem %s8, 1
  %v777 = vld [vmem:[%s776] sm:$0x1]
  %v779 = vlaneseq
  %v780 = vshrl.u32 %v779, 7
  %v781 = vsub.s32 0, %v780
  %v782 = vrot.slane %v777, %v781
  %v784 = vadd.f32 %v775, %v782
  %s785 = scalar_lea.vmem %s5, 64
  %v786 = vld [vmem:[%s785] sm:$0xff]
  %v787 = vld [vmem:[%s785 + $0x8] sm:$0xff]
  %v788 = vld [vmem:[%s785 + $0x10] sm:$0xff]
  %v789 = vld [vmem:[%s785 + $0x18] sm:$0xff]
  %s790 = scalar_lea.vmem %s6, 256
  %v791 = vld [vmem:[%s790] sm:$0xff]
  %v792 = vld [vmem:[%s790 + $0x8] sm:$0xff]
  %v793 = vld [vmem:[%s790 + $0x10] sm:$0xff]
  %v794 = vld [vmem:[%s790 + $0x18] sm:$0xff]
  %v795 = vld [vmem:[%s790 + $0x20] sm:$0xff]
  %v796 = vld [vmem:[%s790 + $0x28] sm:$0xff]
  %v797 = vld [vmem:[%s790 + $0x30] sm:$0xff]
  %v798 = vld [vmem:[%s790 + $0x38] sm:$0xff]
  %v799 = vld [vmem:[%s790 + $0x40] sm:$0xff]
  %v800 = vld [vmem:[%s790 + $0x48] sm:$0xff]
  %v801 = vld [vmem:[%s790 + $0x50] sm:$0xff]
  %v802 = vld [vmem:[%s790 + $0x58] sm:$0xff]
  %v803 = vld [vmem:[%s790 + $0x60] sm:$0xff]
  %v804 = vld [vmem:[%s790 + $0x68] sm:$0xff]
  %v805 = vld [vmem:[%s790 + $0x70] sm:$0xff]
  %v806 = vld [vmem:[%s790 + $0x78] sm:$0xff]
  %807 = vmatprep.subr.mxu0 0.0
  %808 = vmatpush1.msra.mxu0 %v791
  %809 = vmatprep.subr.mxu0 0.0
  %810 = vmatpush1.msra.mxu0 %v792
  %811 = vmatprep.subr.mxu0 0.0
  %812 = vmatpush1.msra.mxu0 %v793
  %813 = vmatprep.subr.mxu0 0.0
  %814 = vmatpush1.msra.mxu0 %v794
  %815 = vmatprep.subr.mxu0 0.0
  %816 = vmatpush1.msra.mxu0 %v795
  %817 = vmatprep.subr.mxu0 0.0
  %818 = vmatpush1.msra.mxu0 %v796
  %819 = vmatprep.subr.mxu0 0.0
  %820 = vmatpush1.msra.mxu0 %v797
  %821 = vmatprep.subr.mxu0 0.0
  %822 = vmatpush1.msra.mxu0 %v798
  %823 = vmatprep.subr.mxu0 0.0
  %824 = vmatpush1.msra.mxu0 %v799
  %825 = vmatprep.subr.mxu0 0.0
  %826 = vmatpush1.msra.mxu0 %v800
  %827 = vmatprep.subr.mxu0 0.0
  %828 = vmatpush1.msra.mxu0 %v801
  %829 = vmatprep.subr.mxu0 0.0
  %830 = vmatpush1.msra.mxu0 %v802
  %831 = vmatprep.subr.mxu0 0.0
  %832 = vmatpush1.msra.mxu0 %v803
  %833 = vmatprep.subr.mxu0 0.0
  %834 = vmatpush1.msra.mxu0 %v804
  %835 = vmatprep.subr.mxu0 0.0
  %836 = vmatpush1.msra.mxu0 %v805
  %837 = vmatprep.subr.mxu0 0.0
  %838 = vmatpush1.msra.mxu0 %v806
  %839 = vmatprep.subr.mxu0 0.0
  %840 = vmatpush1.msra.mxu0 0.0
  %841 = vmatprep.subr.mxu0 0.0
  %842 = vmatpush1.msra.mxu0 0.0
  %843 = vmatprep.subr.mxu0 0.0
  %844 = vmatpush1.msra.mxu0 0.0
  %845 = vmatprep.subr.mxu0 0.0
  %846 = vmatpush1.msra.mxu0 0.0
  %847 = vmatprep.subr.mxu0 0.0
  %848 = vmatpush1.msra.mxu0 0.0
  %849 = vmatprep.subr.mxu0 0.0
  %850 = vmatpush1.msra.mxu0 0.0
  %851 = vmatprep.subr.mxu0 0.0
  %852 = vmatpush1.msra.mxu0 0.0
  %853 = vmatprep.subr.mxu0 0.0
  %854 = vmatpush1.msra.mxu0 0.0
  %855 = vmatprep.subr.mxu0 0.0
  %856 = vmatpush1.msra.mxu0 0.0
  %857 = vmatprep.subr.mxu0 0.0
  %858 = vmatpush1.msra.mxu0 0.0
  %859 = vmatprep.subr.mxu0 0.0
  %860 = vmatpush1.msra.mxu0 0.0
  %861 = vmatprep.subr.mxu0 0.0
  %862 = vmatpush1.msra.mxu0 0.0
  %863 = vmatprep.subr.mxu0 0.0
  %864 = vmatpush1.msra.mxu0 0.0
  %865 = vmatprep.subr.mxu0 0.0
  %866 = vmatpush1.msra.mxu0 0.0
  %867 = vmatprep.subr.mxu0 0.0
  %868 = vmatpush1.msra.mxu0 0.0
  %869 = vmatprep.subr.mxu0 0.0
  %870 = vmatpush1.msra.mxu0 0.0
  %871 = vmatprep.mubr.f32.mxu0 0.0
  %872 = vmatmul.mubr.f32.gmra.mrb[0].mxu0 %v287
  %v873 = vpop.f32.mrb[0].mxu0
  %v874 = vadd.f32 0.0, %v873
  %v875 = vpop.f32.mrb[0].mxu0
  %876 = vdwg.mxu0
  %877 = vmatprep.subr.mxu0 0.0
  %878 = vmatpush1.msra.mxu0 %v786
  %879 = vmatprep.subr.mxu0 0.0
  %880 = vmatpush1.msra.mxu0 %v787
  %881 = vmatprep.subr.mxu0 0.0
  %882 = vmatpush1.msra.mxu0 %v788
  %883 = vmatprep.subr.mxu0 0.0
  %884 = vmatpush1.msra.mxu0 %v789
  %885 = vmatprep.subr.mxu0 0.0
  %886 = vmatpush1.msra.mxu0 0.0
  %887 = vmatprep.subr.mxu0 0.0
  %888 = vmatpush1.msra.mxu0 0.0
  %889 = vmatprep.subr.mxu0 0.0
  %890 = vmatpush1.msra.mxu0 0.0
  %891 = vmatprep.subr.mxu0 0.0
  %892 = vmatpush1.msra.mxu0 0.0
  %893 = vmatprep.subr.mxu0 0.0
  %894 = vmatpush1.msra.mxu0 0.0
  %895 = vmatprep.subr.mxu0 0.0
  %896 = vmatpush1.msra.mxu0 0.0
  %897 = vmatprep.subr.mxu0 0.0
  %898 = vmatpush1.msra.mxu0 0.0
  %899 = vmatprep.subr.mxu0 0.0
  %900 = vmatpush1.msra.mxu0 0.0
  %901 = vmatprep.subr.mxu0 0.0
  %902 = vmatpush1.msra.mxu0 0.0
  %903 = vmatprep.subr.mxu0 0.0
  %904 = vmatpush1.msra.mxu0 0.0
  %905 = vmatprep.subr.mxu0 0.0
  %906 = vmatpush1.msra.mxu0 0.0
  %907 = vmatprep.subr.mxu0 0.0
  %908 = vmatpush1.msra.mxu0 0.0
  %909 = vmatprep.subr.mxu0 0.0
  %910 = vmatpush1.msra.mxu0 0.0
  %911 = vmatprep.subr.mxu0 0.0
  %912 = vmatpush1.msra.mxu0 0.0
  %913 = vmatprep.subr.mxu0 0.0
  %914 = vmatpush1.msra.mxu0 0.0
  %915 = vmatprep.subr.mxu0 0.0
  %916 = vmatpush1.msra.mxu0 0.0
  %917 = vmatprep.subr.mxu0 0.0
  %918 = vmatpush1.msra.mxu0 0.0
  %919 = vmatprep.subr.mxu0 0.0
  %920 = vmatpush1.msra.mxu0 0.0
  %921 = vmatprep.subr.mxu0 0.0
  %922 = vmatpush1.msra.mxu0 0.0
  %923 = vmatprep.subr.mxu0 0.0
  %924 = vmatpush1.msra.mxu0 0.0
  %925 = vmatprep.subr.mxu0 0.0
  %926 = vmatpush1.msra.mxu0 0.0
  %927 = vmatprep.subr.mxu0 0.0
  %928 = vmatpush1.msra.mxu0 0.0
  %929 = vmatprep.subr.mxu0 0.0
  %930 = vmatpush1.msra.mxu0 0.0
  %931 = vmatprep.subr.mxu0 0.0
  %932 = vmatpush1.msra.mxu0 0.0
  %933 = vmatprep.subr.mxu0 0.0
  %934 = vmatpush1.msra.mxu0 0.0
  %935 = vmatprep.subr.mxu0 0.0
  %936 = vmatpush1.msra.mxu0 0.0
  %937 = vmatprep.subr.mxu0 0.0
  %938 = vmatpush1.msra.mxu0 0.0
  %939 = vmatprep.subr.mxu0 0.0
  %940 = vmatpush1.msra.mxu0 0.0
  %941 = vmatprep.mubr.f32.mxu0 0.0
  %942 = vmatmul.mubr.f32.gmra.mrb[0].mxu0 %v380
  %v943 = vpop.f32.mrb[0].mxu0
  %v944 = vadd.f32 %v874, %v943
  %v945 = vpop.f32.mrb[0].mxu0
  %946 = vdwg.mxu0
  %s947 = scalar_lea.vmem %s8, 2
  %v948 = vld [vmem:[%s947] sm:$0x1]
  %v950 = vlaneseq
  %v951 = vshrl.u32 %v950, 7
  %v952 = vsub.s32 0, %v951
  %v953 = vrot.slane %v948, %v952
  %v955 = vadd.f32 %v944, %v953
  %s956 = scalar_lea.vmem %s7, 64
  %v957 = vld [vmem:[%s956] sm:$0xff]
  %v958 = vld [vmem:[%s956 + $0x8] sm:$0xff]
  %v959 = vld [vmem:[%s956 + $0x10] sm:$0xff]
  %v960 = vld [vmem:[%s956 + $0x18] sm:$0xff]
  %s961 = scalar_lea.vmem %s8, 3
  %v962 = vld [vmem:[%s961] sm:$0x1]
  %v964 = vlaneseq
  %v965 = vshrl.u32 %v964, 7
  %v966 = vsub.s32 0, %v965
  %v967 = vrot.slane %v962, %v966
  %969 = vmatprep.subr.mxu0 0.0
  %970 = vmatpush1.msra.mxu0 %v957
  %971 = vmatprep.subr.mxu0 0.0
  %972 = vmatpush1.msra.mxu0 %v958
  %973 = vmatprep.subr.mxu0 0.0
  %974 = vmatpush1.msra.mxu0 %v959
  %975 = vmatprep.subr.mxu0 0.0
  %976 = vmatpush1.msra.mxu0 %v960
  %977 = vmatprep.subr.mxu0 0.0
  %978 = vmatpush1.msra.mxu0 0.0
  %979 = vmatprep.subr.mxu0 0.0
  %980 = vmatpush1.msra.mxu0 0.0
  %981 = vmatprep.subr.mxu0 0.0
  %982 = vmatpush1.msra.mxu0 0.0
  %983 = vmatprep.subr.mxu0 0.0
  %984 = vmatpush1.msra.mxu0 0.0
  %985 = vmatprep.subr.mxu0 0.0
  %986 = vmatpush1.msra.mxu0 0.0
  %987 = vmatprep.subr.mxu0 0.0
  %988 = vmatpush1.msra.mxu0 0.0
  %989 = vmatprep.subr.mxu0 0.0
  %990 = vmatpush1.msra.mxu0 0.0
  %991 = vmatprep.subr.mxu0 0.0
  %992 = vmatpush1.msra.mxu0 0.0
  %993 = vmatprep.subr.mxu0 0.0
  %994 = vmatpush1.msra.mxu0 0.0
  %995 = vmatprep.subr.mxu0 0.0
  %996 = vmatpush1.msra.mxu0 0.0
  %997 = vmatprep.subr.mxu0 0.0
  %998 = vmatpush1.msra.mxu0 0.0
  %999 = vmatprep.subr.mxu0 0.0
  %1000 = vmatpush1.msra.mxu0 0.0
  %1001 = vmatprep.subr.mxu0 0.0
  %1002 = vmatpush1.msra.mxu0 0.0
  %1003 = vmatprep.subr.mxu0 0.0
  %1004 = vmatpush1.msra.mxu0 0.0
  %1005 = vmatprep.subr.mxu0 0.0
  %1006 = vmatpush1.msra.mxu0 0.0
  %1007 = vmatprep.subr.mxu0 0.0
  %1008 = vmatpush1.msra.mxu0 0.0
  %1009 = vmatprep.subr.mxu0 0.0
  %1010 = vmatpush1.msra.mxu0 0.0
  %1011 = vmatprep.subr.mxu0 0.0
  %1012 = vmatpush1.msra.mxu0 0.0
  %1013 = vmatprep.subr.mxu0 0.0
  %1014 = vmatpush1.msra.mxu0 0.0
  %1015 = vmatprep.subr.mxu0 0.0
  %1016 = vmatpush1.msra.mxu0 0.0
  %1017 = vmatprep.subr.mxu0 0.0
  %1018 = vmatpush1.msra.mxu0 0.0
  %1019 = vmatprep.subr.mxu0 0.0
  %1020 = vmatpush1.msra.mxu0 0.0
  %1021 = vmatprep.subr.mxu0 0.0
  %1022 = vmatpush1.msra.mxu0 0.0
  %1023 = vmatprep.subr.mxu0 0.0
  %1024 = vmatpush1.msra.mxu0 0.0
  %1025 = vmatprep.subr.mxu0 0.0
  %1026 = vmatpush1.msra.mxu0 0.0
  %1027 = vmatprep.subr.mxu0 0.0
  %1028 = vmatpush1.msra.mxu0 0.0
  %1029 = vmatprep.subr.mxu0 0.0
  %1030 = vmatpush1.msra.mxu0 0.0
  %1031 = vmatprep.subr.mxu0 0.0
  %1032 = vmatpush1.msra.mxu0 0.0
  %1033 = vmatprep.mubr.f32.mxu0 0.0
  %1034 = vmatmul.mubr.f32.gmra.mrb[0].mxu0 %v457
  %v1035 = vpop.f32.mrb[0].mxu0
  %v1036 = vadd.f32 %v967, %v1035
  %v1037 = vpop.f32.mrb[0].mxu0
  %1038 = vdwg.mxu0
  %v1039 = vxor.u32 %v537, 2147483648
  %v1040 = vmul.f32 %v1039, 1.442695
  %v1041 = vpow.pop %v1040
  %v1042 = vadd.f32 %v1041, 1.0
  %v1043 = vrcp.pop %v1042
  %v1044 = vmul.f32 1.0, %v1043
  %v1045 = vxor.u32 %v784, 2147483648
  %v1046 = vmul.f32 %v1045, 1.442695
  %v1047 = vpow.pop %v1046
  %v1048 = vadd.f32 %v1047, 1.0
  %v1049 = vrcp.pop %v1048
  %v1050 = vmul.f32 1.0, %v1049
  %v1051 = vmul.f32 %v1044, %v1036
  %v1052 = vadd.f32 %v955, %v1051
  %v1053 = vtanh.pop %v1052
  %v1054 = vsub.f32 1.0, %v1050
  %v1055 = vmul.f32 %v1054, %v1053
  %v1056 = vmul.f32 %v1050, %v39
  %v1057 = vadd.f32 %v1055, %v1056
  %v1058 = vld [vmem:[%s9] sm:$0xff]
  %v1059 = vld [vmem:[%s9 + $0x8] sm:$0xff]
  %v1060 = vld [vmem:[%s9 + $0x10] sm:$0xff]
  %v1061 = vld [vmem:[%s9 + $0x18] sm:$0xff]
  %v1062 = vld [vmem:[%s10] sm:$0x1]
  %v1064 = vlaneseq
  %v1065 = vshrl.u32 %v1064, 7
  %v1066 = vsub.s32 0, %v1065
  %v1067 = vrot.slane %v1062, %v1066
  %v1070 = vsel %vm378, %v1057, 0
  %1072 = vmatprep.subr.mxu0 0.0
  %1073 = vmatpush1.msra.mxu0 %v1058
  %1074 = vmatprep.subr.mxu0 0.0
  %1075 = vmatpush1.msra.mxu0 %v1059
  %1076 = vmatprep.subr.mxu0 0.0
  %1077 = vmatpush1.msra.mxu0 %v1060
  %1078 = vmatprep.subr.mxu0 0.0
  %1079 = vmatpush1.msra.mxu0 %v1061
  %1080 = vmatprep.subr.mxu0 0.0
  %1081 = vmatpush1.msra.mxu0 0.0
  %1082 = vmatprep.subr.mxu0 0.0
  %1083 = vmatpush1.msra.mxu0 0.0
  %1084 = vmatprep.subr.mxu0 0.0
  %1085 = vmatpush1.msra.mxu0 0.0
  %1086 = vmatprep.subr.mxu0 0.0
  %1087 = vmatpush1.msra.mxu0 0.0
  %1088 = vmatprep.subr.mxu0 0.0
  %1089 = vmatpush1.msra.mxu0 0.0
  %1090 = vmatprep.subr.mxu0 0.0
  %1091 = vmatpush1.msra.mxu0 0.0
  %1092 = vmatprep.subr.mxu0 0.0
  %1093 = vmatpush1.msra.mxu0 0.0
  %1094 = vmatprep.subr.mxu0 0.0
  %1095 = vmatpush1.msra.mxu0 0.0
  %1096 = vmatprep.subr.mxu0 0.0
  %1097 = vmatpush1.msra.mxu0 0.0
  %1098 = vmatprep.subr.mxu0 0.0
  %1099 = vmatpush1.msra.mxu0 0.0
  %1100 = vmatprep.subr.mxu0 0.0
  %1101 = vmatpush1.msra.mxu0 0.0
  %1102 = vmatprep.subr.mxu0 0.0
  %1103 = vmatpush1.msra.mxu0 0.0
  %1104 = vmatprep.subr.mxu0 0.0
  %1105 = vmatpush1.msra.mxu0 0.0
  %1106 = vmatprep.subr.mxu0 0.0
  %1107 = vmatpush1.msra.mxu0 0.0
  %1108 = vmatprep.subr.mxu0 0.0
  %1109 = vmatpush1.msra.mxu0 0.0
  %1110 = vmatprep.subr.mxu0 0.0
  %1111 = vmatpush1.msra.mxu0 0.0
  %1112 = vmatprep.subr.mxu0 0.0
  %1113 = vmatpush1.msra.mxu0 0.0
  %1114 = vmatprep.subr.mxu0 0.0
  %1115 = vmatpush1.msra.mxu0 0.0
  %1116 = vmatprep.subr.mxu0 0.0
  %1117 = vmatpush1.msra.mxu0 0.0
  %1118 = vmatprep.subr.mxu0 0.0
  %1119 = vmatpush1.msra.mxu0 0.0
  %1120 = vmatprep.subr.mxu0 0.0
  %1121 = vmatpush1.msra.mxu0 0.0
  %1122 = vmatprep.subr.mxu0 0.0
  %1123 = vmatpush1.msra.mxu0 0.0
  %1124 = vmatprep.subr.mxu0 0.0
  %1125 = vmatpush1.msra.mxu0 0.0
  %1126 = vmatprep.subr.mxu0 0.0
  %1127 = vmatpush1.msra.mxu0 0.0
  %1128 = vmatprep.subr.mxu0 0.0
  %1129 = vmatpush1.msra.mxu0 0.0
  %1130 = vmatprep.subr.mxu0 0.0
  %1131 = vmatpush1.msra.mxu0 0.0
  %1132 = vmatprep.subr.mxu0 0.0
  %1133 = vmatpush1.msra.mxu0 0.0
  %1134 = vmatprep.subr.mxu0 0.0
  %1135 = vmatpush1.msra.mxu0 0.0
  %1136 = vmatprep.mubr.f32.mxu0 0.0
  %1137 = vmatmul.mubr.f32.gmra.mrb[0].mxu0 %v1070
  %v1138 = vpop.f32.mrb[0].mxu0
  %v1139 = vadd.f32 %v1067, %v1138
  %v1140 = vpop.f32.mrb[0].mxu0
  %1141 = vdwg.mxu0
  %vm1142 = vcmask 320512
  %1143 = vst.msk [vmem:[%s11] sm:$0x3] %vm1142, %v1139
  // Predicated region
  $region46: #{gnn_sum_rnn_agent_forward.1} parent=0 // pred_check
    _
  $region47: #{gnn_sum_rnn_agent_forward.1} parent=0 // pred_check_branch
    %1145 = sbr.rel (0) target = $region49
  $region48: #{gnn_sum_rnn_agent_forward.1} parent=0 // pred_region
    _
  $region49: #{gnn_sum_rnn_agent_forward.1} parent=0 // pred_fallthru
    _
  // Predicated region
  $region50: #{gnn_sum_rnn_agent_forward.1} parent=0 // pred_check
    _
  $region51: #{gnn_sum_rnn_agent_forward.1} parent=0 // pred_check_branch
    %1147 = sbr.rel (0) target = $region53
  $region52: #{gnn_sum_rnn_agent_forward.1} parent=0 // pred_region
    _
  $region53: #{gnn_sum_rnn_agent_forward.1} parent=0 // pred_fallthru
    _

</llo_original>
